<compile_context>
chip_gen: v7x
topology: tpu7x:2x2x1
jax: 0.10.0
libtpu: 0.0.40
codegen_flags: <defaults>
</compile_context>

<pallas_src>
import jax
import jax.numpy as jnp
from jax.experimental import pallas as pl
from jax.experimental.pallas import tpu as pltpu


_LANE = 128
_SUB = 8


def _round_up(x, m):
    return ((x + m - 1) // m) * m


def _pad2(a, rows, cols):
    return jnp.pad(a, ((0, rows - a.shape[0]), (0, cols - a.shape[1])))


def _match_kernel(d1_ref, d2_ref, cl_ref,
                  xdrug_ref, cell_ref,
                  w0d_ref, w0c_ref, b0_ref,
                  w1_ref, b1_ref,
                  ws0a_ref, ws0b_ref, bs0_ref,
                  ws1_ref, bs1_ref,
                  out_ref):
    tb = d1_ref.shape[0]
    bf16, f32 = jnp.bfloat16, jnp.float32

    def gather(idx_ref, table_ref):
        # Fused row gather: one-hot built from int32 ids, times the resident
        # table. Exact (one-hot entries are 0/1 so gathered values equal the
        # bf16 table rows) and MXU-friendly; avoids dynamic-gather lowering.
        n = table_ref.shape[0]
        ids = idx_ref[...]                                        # (tb, 1) int32
        cols = jax.lax.broadcasted_iota(jnp.int32, (tb, n), 1)
        onehot = (ids == cols).astype(bf16)                       # (tb, n)
        return jnp.dot(onehot, table_ref[...], preferred_element_type=f32)

    x1 = gather(d1_ref, xdrug_ref)        # (tb, DD_p) f32
    x2 = gather(d2_ref, xdrug_ref)
    cf = gather(cl_ref, cell_ref)         # (tb, DC_p) f32

    # drug_cell_net layer 0, split-weight form (no lane concat):
    #   concat(drug, cell) @ W0 == drug @ W0[:Dd] + cell @ W0[Dd:]
    # The cell contribution is shared by both branches -> compute once.
    cpart = jnp.dot(cf.astype(bf16), w0c_ref[...],
                    preferred_element_type=f32) + b0_ref[...]
    h1 = jnp.maximum(jnp.dot(x1.astype(bf16), w0d_ref[...],
                             preferred_element_type=f32) + cpart, 0.0)
    h2 = jnp.maximum(jnp.dot(x2.astype(bf16), w0d_ref[...],
                             preferred_element_type=f32) + cpart, 0.0)

    # drug_cell_net layer 1 (shared weights): run per branch instead of a
    # sublane concat (which would materialize a VMEM copy through vst slots).
    h1 = jnp.maximum(jnp.dot(h1.astype(bf16), w1_ref[...],
                             preferred_element_type=f32) + b1_ref[...], 0.0)
    h2 = jnp.maximum(jnp.dot(h2.astype(bf16), w1_ref[...],
                             preferred_element_type=f32) + b1_ref[...], 0.0)

    # synergy_net layer 0 on concat([h1, h2], 1), split-weight form.
    s = jnp.dot(h1.astype(bf16), ws0a_ref[...], preferred_element_type=f32)
    s = s + jnp.dot(h2.astype(bf16), ws0b_ref[...], preferred_element_type=f32)
    s = jnp.maximum(s + bs0_ref[...], 0.0)

    # synergy_net output layer (no activation). Dout kept at 8 lanes so the
    # store and the post-call read-back are tiny (real column is 0).
    out = jnp.dot(s.astype(bf16), ws1_ref[...],
                  preferred_element_type=f32) + bs1_ref[...]
    out_ref[...] = out.astype(out_ref.dtype)


def match_model_forward(pair_idx, cell_lines, x_drugs, cell_line_features,
                        params, *, tile_b=None):
    """pair_idx: (B,2) int32 drug indices; cell_lines: (B,) int32 cell indices."""
    B = pair_idx.shape[0]
    nd, D_drug = x_drugs.shape
    nc, D_cell = cell_line_features.shape
    w0, b0, w1, b1, ws0, bs0, ws1, bs1 = params
    H0, H1 = w0.shape[1], w1.shape[1]
    S0, Dout = ws0.shape[1], ws1.shape[1]

    # Lane-pad feature dims to 128; pad table row counts to 128 so the one-hot
    # gather matmuls are fully vreg-aligned (tables are tiny and VMEM-resident,
    # so the padding costs nothing meaningful).
    DD_p, DC_p = _round_up(D_drug, _LANE), _round_up(D_cell, _LANE)
    ND_p, NC_p = _round_up(nd, _LANE), _round_up(nc, _LANE)
    H0_p, H1_p = _round_up(H0, _LANE), _round_up(H1, _LANE)
    S0_p = _round_up(S0, _LANE)
    DOUT_p = _round_up(Dout, 8)   # deliberately NOT 128: thin output write

    # Batch tile: aim for >=4 grid steps (so both v7x TensorCores get work),
    # cap at 512 rows (per-tile VMEM stays tiny even on v7x's 64 MiB VMEM).
    if tile_b is None:
        tb = min(512, _round_up(max((B + 3) // 4, 1), _SUB))
    else:
        tb = _round_up(tile_b, _SUB)
    tb = max(tb, _SUB)
    Bp = _round_up(B, tb)
    grid = (Bp // tb,)

    f32, bf16, i32 = jnp.float32, jnp.bfloat16, jnp.int32

    # Resident tables & weights -> padded bf16 MXU operands; biases stay f32.
    xdrug_p = _pad2(x_drugs, ND_p, DD_p).astype(bf16)
    cell_p = _pad2(cell_line_features, NC_p, DC_p).astype(bf16)
    w0d = _pad2(w0[:D_drug, :], DD_p, H0_p).astype(bf16)     # drug half of W0
    w0c = _pad2(w0[D_drug:, :], DC_p, H0_p).astype(bf16)     # cell half of W0
    b0p = _pad2(b0, 1, H0_p).astype(f32)
    w1p = _pad2(w1, H0_p, H1_p).astype(bf16)
    b1p = _pad2(b1, 1, H1_p).astype(f32)
    ws0a = _pad2(ws0[:H1, :], H1_p, S0_p).astype(bf16)       # acts on h1
    ws0b = _pad2(ws0[H1:, :], H1_p, S0_p).astype(bf16)       # acts on h2
    bs0p = _pad2(bs0, 1, S0_p).astype(f32)
    ws1p = _pad2(ws1, S0_p, DOUT_p).astype(bf16)
    bs1p = _pad2(bs1, 1, DOUT_p).astype(f32)

    # Per-row kernel inputs: only three int32 indices. Pad rows with index 0
    # (valid); padded output rows are sliced off after the call.
    d1 = _pad2(pair_idx[:, 0:1].astype(i32), Bp, 1)
    d2 = _pad2(pair_idx[:, 1:2].astype(i32), Bp, 1)
    cl = _pad2(cell_lines.reshape(B, 1).astype(i32), Bp, 1)

    def batch_spec(cols):
        return pl.BlockSpec((tb, cols), lambda i: (i, 0))

    def full_spec(shape):
        # Grid-invariant blocks: Pallas only re-DMAs a block when its index
        # changes, so these are fetched once.
        # TODO(synk): add pipeline_mode=pl.Buffered(1) for these once verified
        # on the target jax version (minor VMEM hygiene only).
        return pl.BlockSpec(shape, lambda i: (0, 0))

    flops = 2 * B * (2 * D_drug * H0 + D_cell * H0
                     + 2 * H0 * H1 + 2 * H1 * S0 + S0 * Dout)
    bytes_accessed = (3 * Bp * 4 + Bp * DOUT_p * 4
                      + sum(int(a.size) * 2 for a in
                            (xdrug_p, cell_p, w0d, w0c, w1p, ws0a, ws0b, ws1p))
                      + sum(int(a.size) * 4 for a in (b0p, b1p, bs0p, bs1p)))
    cost = pl.CostEstimate(flops=int(flops), transcendentals=0,
                           bytes_accessed=int(bytes_accessed))

    out_p = pl.pallas_call(
        _match_kernel,
        out_shape=jax.ShapeDtypeStruct((Bp, DOUT_p), f32),
        grid_spec=pltpu.PrefetchScalarGridSpec(
            num_scalar_prefetch=0,
            grid=grid,
            in_specs=[
                batch_spec(1),                   # drug-1 row indices
                batch_spec(1),                   # drug-2 row indices
                batch_spec(1),                   # cell-line row indices
                full_spec((ND_p, DD_p)),         # x_drugs table (resident)
                full_spec((NC_p, DC_p)),         # cell feature table (resident)
                full_spec((DD_p, H0_p)),         # w0 drug half
                full_spec((DC_p, H0_p)),         # w0 cell half
                full_spec((1, H0_p)),            # b0
                full_spec((H0_p, H1_p)),         # w1
                full_spec((1, H1_p)),            # b1
                full_spec((H1_p, S0_p)),         # ws0 top half (h1)
                full_spec((H1_p, S0_p)),         # ws0 bottom half (h2)
                full_spec((1, S0_p)),            # bs0
                full_spec((S0_p, DOUT_p)),       # ws1
                full_spec((1, DOUT_p)),          # bs1
            ],
            out_specs=batch_spec(DOUT_p),
        ),
        compiler_params=pltpu.CompilerParams(
            dimension_semantics=("parallel",)),
        cost_estimate=cost,
    )(d1, d2, cl, xdrug_p, cell_p, w0d, w0c, b0p, w1p, b1p,
      ws0a, ws0b, bs0p, ws1p, bs1p)

    return out_p[:B, :Dout]


def _init_linear(key, fan_in, fan_out):
    """Deterministic PyTorch-style uniform(-1/sqrt(fan_in), 1/sqrt(fan_in))."""
    kw, kb = jax.random.split(key)
    bound = 1.0 / jnp.sqrt(fan_in)
    w = jax.random.uniform(kw, (fan_in, fan_out), jnp.float32, -bound, bound)
    b = jax.random.uniform(kb, (1, fan_out), jnp.float32, -bound, bound)
    return w, b


def _reference_forward(pair_idx, cell_lines, x_drugs, cells, params):
    w0, b0, w1, b1, ws0, bs0, ws1, bs1 = params
    cf = cells[cell_lines]
    x1 = jnp.concatenate([x_drugs[pair_idx[:, 0]], cf], axis=1)
    x2 = jnp.concatenate([x_drugs[pair_idx[:, 1]], cf], axis=1)

    def net(x):
        h = jnp.maximum(x @ w0 + b0, 0.0)
        return jnp.maximum(h @ w1 + b1, 0.0)

    h1, h2 = net(x1), net(x2)
    z = jnp.concatenate([h1, h2], axis=1)
    s = jnp.maximum(z @ ws0 + bs0, 0.0)
    return s @ ws1 + bs1


if __name__ == "__main__":
    # Synthetic "data" / "config" at small shapes.
    n_drugs, n_cells = 10, 5
    D_drug, D_cell = 32, 16
    drug_cell_layers = [64, 32]        # drug_embed_len == drug_cell_layers[-1]
    syn_layers = [32, 1]
    B = 8

    key = jax.random.PRNGKey(0)
    ks = jax.random.split(key, 8)

    x_drugs = jax.random.normal(ks[0], (n_drugs, D_drug), jnp.float32)
    cell_line_features = jax.random.normal(ks[1], (n_cells, D_cell), jnp.float32)

    pair_idx = jax.random.randint(ks[2], (B, 2), 0, n_drugs)
    cell_lines = jax.random.randint(ks[3], (B,), 0, n_cells)

    # Parameters (deterministic init).
    Din = D_drug + D_cell
    w0, b0 = _init_linear(ks[4], Din, drug_cell_layers[0])
    w1, b1 = _init_linear(ks[5], drug_cell_layers[0], drug_cell_layers[1])
    ws0, bs0 = _init_linear(ks[6], drug_cell_layers[1] * 2, syn_layers[0])
    ws1, bs1 = _init_linear(ks[7], syn_layers[0], syn_layers[1])
    params = (w0, b0, w1, b1, ws0, bs0, ws1, bs1)

    out = match_model_forward(pair_idx, cell_lines, x_drugs,
                              cell_line_features, params)
    out = jax.block_until_ready(out)

    ref = _reference_forward(pair_idx, cell_lines, x_drugs,
                             cell_line_features, params)
    assert out.shape == (B, 1)
    # bf16 MXU operands with f32 accumulation -> relaxed tolerance.
    assert jnp.allclose(out, ref, atol=5e-2, rtol=5e-2)

    print("KERNEL_OK")
</pallas_src>

<mosaic_0001>
module attributes {stable_mosaic.version = 11 : i64} {
  func.func @_match_kernel(%arg0: i32, %arg1: memref<8x1xi32, #tpu.memory_space<vmem>>, %arg2: memref<8x1xi32, #tpu.memory_space<vmem>>, %arg3: memref<8x1xi32, #tpu.memory_space<vmem>>, %arg4: memref<128x128xbf16, #tpu.memory_space<vmem>>, %arg5: memref<128x128xbf16, #tpu.memory_space<vmem>>, %arg6: memref<128x128xbf16, #tpu.memory_space<vmem>>, %arg7: memref<128x128xbf16, #tpu.memory_space<vmem>>, %arg8: memref<1x128xf32, #tpu.memory_space<vmem>>, %arg9: memref<128x128xbf16, #tpu.memory_space<vmem>>, %arg10: memref<1x128xf32, #tpu.memory_space<vmem>>, %arg11: memref<128x128xbf16, #tpu.memory_space<vmem>>, %arg12: memref<128x128xbf16, #tpu.memory_space<vmem>>, %arg13: memref<1x128xf32, #tpu.memory_space<vmem>>, %arg14: memref<128x8xbf16, #tpu.memory_space<vmem>>, %arg15: memref<1x8xf32, #tpu.memory_space<vmem>>, %arg16: memref<8x8xf32, #tpu.memory_space<vmem>>) attributes {dimension_semantics = [#tpu.dimension_semantics<parallel>], iteration_bounds = array<i64: 1>, scalar_prefetch = 0 : i64, scratch_operands = 0 : i64, tpu.core_type = #tpu.core_type<tc>, window_params = [{transform_indices = @transform_0, window_bounds = array<i64: 8, 1>}, {transform_indices = @transform_1, window_bounds = array<i64: 8, 1>}, {transform_indices = @transform_2, window_bounds = array<i64: 8, 1>}, {pipeline_mode = #tpu.pipeline_mode<synchronous>, transform_indices = @transform_3, window_bounds = array<i64: 128, 128>}, {pipeline_mode = #tpu.pipeline_mode<synchronous>, transform_indices = @transform_4, window_bounds = array<i64: 128, 128>}, {pipeline_mode = #tpu.pipeline_mode<synchronous>, transform_indices = @transform_5, window_bounds = array<i64: 128, 128>}, {pipeline_mode = #tpu.pipeline_mode<synchronous>, transform_indices = @transform_6, window_bounds = array<i64: 128, 128>}, {pipeline_mode = #tpu.pipeline_mode<synchronous>, transform_indices = @transform_7, window_bounds = array<i64: 1, 128>}, {pipeline_mode = #tpu.pipeline_mode<synchronous>, transform_indices = @transform_8, window_bounds = array<i64: 128, 128>}, {pipeline_mode = #tpu.pipeline_mode<synchronous>, transform_indices = @transform_9, window_bounds = array<i64: 1, 128>}, {pipeline_mode = #tpu.pipeline_mode<synchronous>, transform_indices = @transform_10, window_bounds = array<i64: 128, 128>}, {pipeline_mode = #tpu.pipeline_mode<synchronous>, transform_indices = @transform_11, window_bounds = array<i64: 128, 128>}, {pipeline_mode = #tpu.pipeline_mode<synchronous>, transform_indices = @transform_12, window_bounds = array<i64: 1, 128>}, {pipeline_mode = #tpu.pipeline_mode<synchronous>, transform_indices = @transform_13, window_bounds = array<i64: 128, 8>}, {pipeline_mode = #tpu.pipeline_mode<synchronous>, transform_indices = @transform_14, window_bounds = array<i64: 1, 8>}, {transform_indices = @transform_15, window_bounds = array<i64: 8, 8>}]} {
    %c0 = arith.constant 0 : index
    %c0_0 = arith.constant 0 : index
    %0 = vector.load %arg1[%c0, %c0_0] : memref<8x1xi32, #tpu.memory_space<vmem>>, vector<8x1xi32>
    %1 = tpu.iota {dimensions = array<i32: 1>} : vector<8x128xi32>
    %2 = vector.broadcast %0 : vector<8x1xi32> to vector<8x128xi32>
    %3 = arith.cmpi eq, %2, %1 : vector<8x128xi32>
    %4 = arith.extui %3 : vector<8x128xi1> to vector<8x128xi32>
    %5 = arith.sitofp %4 : vector<8x128xi32> to vector<8x128xf32>
    %6 = arith.truncf %5 : vector<8x128xf32> to vector<8x128xbf16>
    %c0_1 = arith.constant 0 : index
    %c0_2 = arith.constant 0 : index
    %7 = vector.load %arg4[%c0_1, %c0_2] : memref<128x128xbf16, #tpu.memory_space<vmem>>, vector<128x128xbf16>
    %cst = arith.constant dense<0.000000e+00> : vector<8x128xf32>
    %8 = tpu.matmul %6, %7, %cst {dimension_numbers = #tpu.dot_dimension_numbers<[1], [0], [0], [1], [0, 0, 1, 1], [], []>} : vector<8x128xbf16>, vector<128x128xbf16>, vector<8x128xf32> -> vector<8x128xf32>
    %c0_3 = arith.constant 0 : index
    %c0_4 = arith.constant 0 : index
    %9 = vector.load %arg2[%c0_3, %c0_4] : memref<8x1xi32, #tpu.memory_space<vmem>>, vector<8x1xi32>
    %10 = tpu.iota {dimensions = array<i32: 1>} : vector<8x128xi32>
    %11 = vector.broadcast %9 : vector<8x1xi32> to vector<8x128xi32>
    %12 = arith.cmpi eq, %11, %10 : vector<8x128xi32>
    %13 = arith.extui %12 : vector<8x128xi1> to vector<8x128xi32>
    %14 = arith.sitofp %13 : vector<8x128xi32> to vector<8x128xf32>
    %15 = arith.truncf %14 : vector<8x128xf32> to vector<8x128xbf16>
    %c0_5 = arith.constant 0 : index
    %c0_6 = arith.constant 0 : index
    %16 = vector.load %arg4[%c0_5, %c0_6] : memref<128x128xbf16, #tpu.memory_space<vmem>>, vector<128x128xbf16>
    %cst_7 = arith.constant dense<0.000000e+00> : vector<8x128xf32>
    %17 = tpu.matmul %15, %16, %cst_7 {dimension_numbers = #tpu.dot_dimension_numbers<[1], [0], [0], [1], [0, 0, 1, 1], [], []>} : vector<8x128xbf16>, vector<128x128xbf16>, vector<8x128xf32> -> vector<8x128xf32>
    %c0_8 = arith.constant 0 : index
    %c0_9 = arith.constant 0 : index
    %18 = vector.load %arg3[%c0_8, %c0_9] : memref<8x1xi32, #tpu.memory_space<vmem>>, vector<8x1xi32>
    %19 = tpu.iota {dimensions = array<i32: 1>} : vector<8x128xi32>
    %20 = vector.broadcast %18 : vector<8x1xi32> to vector<8x128xi32>
    %21 = arith.cmpi eq, %20, %19 : vector<8x128xi32>
    %22 = arith.extui %21 : vector<8x128xi1> to vector<8x128xi32>
    %23 = arith.sitofp %22 : vector<8x128xi32> to vector<8x128xf32>
    %24 = arith.truncf %23 : vector<8x128xf32> to vector<8x128xbf16>
    %c0_10 = arith.constant 0 : index
    %c0_11 = arith.constant 0 : index
    %25 = vector.load %arg5[%c0_10, %c0_11] : memref<128x128xbf16, #tpu.memory_space<vmem>>, vector<128x128xbf16>
    %cst_12 = arith.constant dense<0.000000e+00> : vector<8x128xf32>
    %26 = tpu.matmul %24, %25, %cst_12 {dimension_numbers = #tpu.dot_dimension_numbers<[1], [0], [0], [1], [0, 0, 1, 1], [], []>} : vector<8x128xbf16>, vector<128x128xbf16>, vector<8x128xf32> -> vector<8x128xf32>
    %27 = arith.truncf %26 : vector<8x128xf32> to vector<8x128xbf16>
    %c0_13 = arith.constant 0 : index
    %c0_14 = arith.constant 0 : index
    %28 = vector.load %arg7[%c0_13, %c0_14] : memref<128x128xbf16, #tpu.memory_space<vmem>>, vector<128x128xbf16>
    %cst_15 = arith.constant dense<0.000000e+00> : vector<8x128xf32>
    %29 = tpu.matmul %27, %28, %cst_15 {dimension_numbers = #tpu.dot_dimension_numbers<[1], [0], [0], [1], [0, 0, 1, 1], [], []>} : vector<8x128xbf16>, vector<128x128xbf16>, vector<8x128xf32> -> vector<8x128xf32>
    %c0_16 = arith.constant 0 : index
    %c0_17 = arith.constant 0 : index
    %30 = vector.load %arg8[%c0_16, %c0_17] : memref<1x128xf32, #tpu.memory_space<vmem>>, vector<1x128xf32>
    %31 = vector.broadcast %30 : vector<1x128xf32> to vector<8x128xf32>
    %32 = arith.addf %29, %31 : vector<8x128xf32>
    %33 = arith.truncf %8 : vector<8x128xf32> to vector<8x128xbf16>
    %c0_18 = arith.constant 0 : index
    %c0_19 = arith.constant 0 : index
    %34 = vector.load %arg6[%c0_18, %c0_19] : memref<128x128xbf16, #tpu.memory_space<vmem>>, vector<128x128xbf16>
    %cst_20 = arith.constant dense<0.000000e+00> : vector<8x128xf32>
    %35 = tpu.matmul %33, %34, %cst_20 {dimension_numbers = #tpu.dot_dimension_numbers<[1], [0], [0], [1], [0, 0, 1, 1], [], []>} : vector<8x128xbf16>, vector<128x128xbf16>, vector<8x128xf32> -> vector<8x128xf32>
    %36 = arith.addf %35, %32 : vector<8x128xf32>
    %cst_21 = arith.constant 0.000000e+00 : f32
    %37 = vector.broadcast %cst_21 : f32 to vector<8x128xf32>
    %38 = arith.maximumf %36, %37 : vector<8x128xf32>
    %39 = arith.truncf %17 : vector<8x128xf32> to vector<8x128xbf16>
    %c0_22 = arith.constant 0 : index
    %c0_23 = arith.constant 0 : index
    %40 = vector.load %arg6[%c0_22, %c0_23] : memref<128x128xbf16, #tpu.memory_space<vmem>>, vector<128x128xbf16>
    %cst_24 = arith.constant dense<0.000000e+00> : vector<8x128xf32>
    %41 = tpu.matmul %39, %40, %cst_24 {dimension_numbers = #tpu.dot_dimension_numbers<[1], [0], [0], [1], [0, 0, 1, 1], [], []>} : vector<8x128xbf16>, vector<128x128xbf16>, vector<8x128xf32> -> vector<8x128xf32>
    %42 = arith.addf %41, %32 : vector<8x128xf32>
    %cst_25 = arith.constant 0.000000e+00 : f32
    %43 = vector.broadcast %cst_25 : f32 to vector<8x128xf32>
    %44 = arith.maximumf %42, %43 : vector<8x128xf32>
    %45 = arith.truncf %38 : vector<8x128xf32> to vector<8x128xbf16>
    %c0_26 = arith.constant 0 : index
    %c0_27 = arith.constant 0 : index
    %46 = vector.load %arg9[%c0_26, %c0_27] : memref<128x128xbf16, #tpu.memory_space<vmem>>, vector<128x128xbf16>
    %cst_28 = arith.constant dense<0.000000e+00> : vector<8x128xf32>
    %47 = tpu.matmul %45, %46, %cst_28 {dimension_numbers = #tpu.dot_dimension_numbers<[1], [0], [0], [1], [0, 0, 1, 1], [], []>} : vector<8x128xbf16>, vector<128x128xbf16>, vector<8x128xf32> -> vector<8x128xf32>
    %c0_29 = arith.constant 0 : index
    %c0_30 = arith.constant 0 : index
    %48 = vector.load %arg10[%c0_29, %c0_30] : memref<1x128xf32, #tpu.memory_space<vmem>>, vector<1x128xf32>
    %49 = vector.broadcast %48 : vector<1x128xf32> to vector<8x128xf32>
    %50 = arith.addf %47, %49 : vector<8x128xf32>
    %cst_31 = arith.constant 0.000000e+00 : f32
    %51 = vector.broadcast %cst_31 : f32 to vector<8x128xf32>
    %52 = arith.maximumf %50, %51 : vector<8x128xf32>
    %53 = arith.truncf %44 : vector<8x128xf32> to vector<8x128xbf16>
    %c0_32 = arith.constant 0 : index
    %c0_33 = arith.constant 0 : index
    %54 = vector.load %arg9[%c0_32, %c0_33] : memref<128x128xbf16, #tpu.memory_space<vmem>>, vector<128x128xbf16>
    %cst_34 = arith.constant dense<0.000000e+00> : vector<8x128xf32>
    %55 = tpu.matmul %53, %54, %cst_34 {dimension_numbers = #tpu.dot_dimension_numbers<[1], [0], [0], [1], [0, 0, 1, 1], [], []>} : vector<8x128xbf16>, vector<128x128xbf16>, vector<8x128xf32> -> vector<8x128xf32>
    %c0_35 = arith.constant 0 : index
    %c0_36 = arith.constant 0 : index
    %56 = vector.load %arg10[%c0_35, %c0_36] : memref<1x128xf32, #tpu.memory_space<vmem>>, vector<1x128xf32>
    %57 = vector.broadcast %56 : vector<1x128xf32> to vector<8x128xf32>
    %58 = arith.addf %55, %57 : vector<8x128xf32>
    %cst_37 = arith.constant 0.000000e+00 : f32
    %59 = vector.broadcast %cst_37 : f32 to vector<8x128xf32>
    %60 = arith.maximumf %58, %59 : vector<8x128xf32>
    %61 = arith.truncf %52 : vector<8x128xf32> to vector<8x128xbf16>
    %c0_38 = arith.constant 0 : index
    %c0_39 = arith.constant 0 : index
    %62 = vector.load %arg11[%c0_38, %c0_39] : memref<128x128xbf16, #tpu.memory_space<vmem>>, vector<128x128xbf16>
    %cst_40 = arith.constant dense<0.000000e+00> : vector<8x128xf32>
    %63 = tpu.matmul %61, %62, %cst_40 {dimension_numbers = #tpu.dot_dimension_numbers<[1], [0], [0], [1], [0, 0, 1, 1], [], []>} : vector<8x128xbf16>, vector<128x128xbf16>, vector<8x128xf32> -> vector<8x128xf32>
    %64 = arith.truncf %60 : vector<8x128xf32> to vector<8x128xbf16>
    %c0_41 = arith.constant 0 : index
    %c0_42 = arith.constant 0 : index
    %65 = vector.load %arg12[%c0_41, %c0_42] : memref<128x128xbf16, #tpu.memory_space<vmem>>, vector<128x128xbf16>
    %cst_43 = arith.constant dense<0.000000e+00> : vector<8x128xf32>
    %66 = tpu.matmul %64, %65, %cst_43 {dimension_numbers = #tpu.dot_dimension_numbers<[1], [0], [0], [1], [0, 0, 1, 1], [], []>} : vector<8x128xbf16>, vector<128x128xbf16>, vector<8x128xf32> -> vector<8x128xf32>
    %67 = arith.addf %63, %66 : vector<8x128xf32>
    %c0_44 = arith.constant 0 : index
    %c0_45 = arith.constant 0 : index
    %68 = vector.load %arg13[%c0_44, %c0_45] : memref<1x128xf32, #tpu.memory_space<vmem>>, vector<1x128xf32>
    %69 = vector.broadcast %68 : vector<1x128xf32> to vector<8x128xf32>
    %70 = arith.addf %67, %69 : vector<8x128xf32>
    %cst_46 = arith.constant 0.000000e+00 : f32
    %71 = vector.broadcast %cst_46 : f32 to vector<8x128xf32>
    %72 = arith.maximumf %70, %71 : vector<8x128xf32>
    %73 = arith.truncf %72 : vector<8x128xf32> to vector<8x128xbf16>
    %c0_47 = arith.constant 0 : index
    %c0_48 = arith.constant 0 : index
    %74 = vector.load %arg14[%c0_47, %c0_48] : memref<128x8xbf16, #tpu.memory_space<vmem>>, vector<128x8xbf16>
    %cst_49 = arith.constant dense<0.000000e+00> : vector<8x8xf32>
    %75 = tpu.matmul %73, %74, %cst_49 {dimension_numbers = #tpu.dot_dimension_numbers<[1], [0], [0], [1], [0, 0, 1, 1], [], []>} : vector<8x128xbf16>, vector<128x8xbf16>, vector<8x8xf32> -> vector<8x8xf32>
    %c0_50 = arith.constant 0 : index
    %c0_51 = arith.constant 0 : index
    %76 = vector.load %arg15[%c0_50, %c0_51] : memref<1x8xf32, #tpu.memory_space<vmem>>, vector<1x8xf32>
    %77 = vector.broadcast %76 : vector<1x8xf32> to vector<8x8xf32>
    %78 = arith.addf %75, %77 : vector<8x8xf32>
    %c0_52 = arith.constant 0 : index
    %c0_53 = arith.constant 0 : index
    %79 = vector.load %arg16[%c0_52, %c0_53] : memref<8x8xf32, #tpu.memory_space<vmem>>, vector<8x8xf32>
    tpu.vector_store %arg16[%c0_52, %c0_53], %78 {strides = array<i32>} : memref<8x8xf32, #tpu.memory_space<vmem>>, vector<8x8xf32>,
    return
  }
  func.func @transform_0(%arg0: i32) -> (i32, i32) {
    %c0_i32 = arith.constant 0 : i32
    %c0_i32_0 = arith.constant 0 : i32
    return %arg0, %c0_i32 : i32, i32
  }
  func.func @transform_1(%arg0: i32) -> (i32, i32) {
    %c0_i32 = arith.constant 0 : i32
    %c0_i32_0 = arith.constant 0 : i32
    return %arg0, %c0_i32 : i32, i32
  }
  func.func @transform_2(%arg0: i32) -> (i32, i32) {
    %c0_i32 = arith.constant 0 : i32
    %c0_i32_0 = arith.constant 0 : i32
    return %arg0, %c0_i32 : i32, i32
  }
  func.func @transform_3(%arg0: i32) -> (i32, i32) {
    %c0_i32 = arith.constant 0 : i32
    %c0_i32_0 = arith.constant 0 : i32
    %c0_i32_1 = arith.constant 0 : i32
    return %c0_i32, %c0_i32_0 : i32, i32
  }
  func.func @transform_4(%arg0: i32) -> (i32, i32) {
    %c0_i32 = arith.constant 0 : i32
    %c0_i32_0 = arith.constant 0 : i32
    %c0_i32_1 = arith.constant 0 : i32
    return %c0_i32, %c0_i32_0 : i32, i32
  }
  func.func @transform_5(%arg0: i32) -> (i32, i32) {
    %c0_i32 = arith.constant 0 : i32
    %c0_i32_0 = arith.constant 0 : i32
    %c0_i32_1 = arith.constant 0 : i32
    return %c0_i32, %c0_i32_0 : i32, i32
  }
  func.func @transform_6(%arg0: i32) -> (i32, i32) {
    %c0_i32 = arith.constant 0 : i32
    %c0_i32_0 = arith.constant 0 : i32
    %c0_i32_1 = arith.constant 0 : i32
    return %c0_i32, %c0_i32_0 : i32, i32
  }
  func.func @transform_7(%arg0: i32) -> (i32, i32) {
    %c0_i32 = arith.constant 0 : i32
    %c0_i32_0 = arith.constant 0 : i32
    %c0_i32_1 = arith.constant 0 : i32
    return %c0_i32, %c0_i32_0 : i32, i32
  }
  func.func @transform_8(%arg0: i32) -> (i32, i32) {
    %c0_i32 = arith.constant 0 : i32
    %c0_i32_0 = arith.constant 0 : i32
    %c0_i32_1 = arith.constant 0 : i32
    return %c0_i32, %c0_i32_0 : i32, i32
  }
  func.func @transform_9(%arg0: i32) -> (i32, i32) {
    %c0_i32 = arith.constant 0 : i32
    %c0_i32_0 = arith.constant 0 : i32
    %c0_i32_1 = arith.constant 0 : i32
    return %c0_i32, %c0_i32_0 : i32, i32
  }
  func.func @transform_10(%arg0: i32) -> (i32, i32) {
    %c0_i32 = arith.constant 0 : i32
    %c0_i32_0 = arith.constant 0 : i32
    %c0_i32_1 = arith.constant 0 : i32
    return %c0_i32, %c0_i32_0 : i32, i32
  }
  func.func @transform_11(%arg0: i32) -> (i32, i32) {
    %c0_i32 = arith.constant 0 : i32
    %c0_i32_0 = arith.constant 0 : i32
    %c0_i32_1 = arith.constant 0 : i32
    return %c0_i32, %c0_i32_0 : i32, i32
  }
  func.func @transform_12(%arg0: i32) -> (i32, i32) {
    %c0_i32 = arith.constant 0 : i32
    %c0_i32_0 = arith.constant 0 : i32
    %c0_i32_1 = arith.constant 0 : i32
    return %c0_i32, %c0_i32_0 : i32, i32
  }
  func.func @transform_13(%arg0: i32) -> (i32, i32) {
    %c0_i32 = arith.constant 0 : i32
    %c0_i32_0 = arith.constant 0 : i32
    %c0_i32_1 = arith.constant 0 : i32
    return %c0_i32, %c0_i32_0 : i32, i32
  }
  func.func @transform_14(%arg0: i32) -> (i32, i32) {
    %c0_i32 = arith.constant 0 : i32
    %c0_i32_0 = arith.constant 0 : i32
    %c0_i32_1 = arith.constant 0 : i32
    return %c0_i32, %c0_i32_0 : i32, i32
  }
  func.func @transform_15(%arg0: i32) -> (i32, i32) {
    %c0_i32 = arith.constant 0 : i32
    %c0_i32_0 = arith.constant 0 : i32
    return %arg0, %c0_i32 : i32, i32
  }
}

</mosaic_0001>

<llo_original>
// kernel: tpu_custom_call.1
$region0: #{tpu_custom_call.1}
  #allocation0 [shape = 'u32[]', space=smem, size = 0x4, offset = 0x4, fixed_abs, tag = 'smem constant byte address 0x4 - core index']
  #allocation1 [shape = 'u32[144,128]{1,0:T(1,128)}', space=vmem, size = 0x12000, scoped, tag = 'internal scratch']
  %s0 = inlined_call_operand.vmem [shape: s32[8,1], index: 0, kind: input, shape index: {}]
  %s1 = inlined_call_operand.vmem [shape: s32[8,1], index: 1, kind: input, shape index: {}]
  %s2 = inlined_call_operand.vmem [shape: s32[8,1], index: 2, kind: input, shape index: {}]
  %s3 = inlined_call_operand.vmem [shape: bf16[128,128], index: 3, kind: input, shape index: {}]
  %s4 = inlined_call_operand.hbm [shape: bf16[128,128], index: 4, kind: input, shape index: {}]
  %s5 = inlined_call_operand.hbm [shape: bf16[128,128], index: 5, kind: input, shape index: {}]
  %s6 = inlined_call_operand.hbm [shape: bf16[128,128], index: 6, kind: input, shape index: {}]
  %s7 = inlined_call_operand.hbm [shape: f32[1,128], index: 7, kind: input, shape index: {}]
  %s8 = inlined_call_operand.hbm [shape: bf16[128,128], index: 8, kind: input, shape index: {}]
  %s9 = inlined_call_operand.hbm [shape: f32[1,128], index: 9, kind: input, shape index: {}]
  %s10 = inlined_call_operand.vmem [shape: bf16[128,128], index: 10, kind: input, shape index: {}]
  %s11 = inlined_call_operand.hbm [shape: bf16[128,128], index: 11, kind: input, shape index: {}]
  %s12 = inlined_call_operand.vmem [shape: f32[1,128], index: 12, kind: input, shape index: {}]
  %s13 = inlined_call_operand.vmem [shape: bf16[128,8], index: 13, kind: input, shape index: {}]
  %s14 = inlined_call_operand.vmem [shape: f32[1,8], index: 14, kind: input, shape index: {}]
  %s15 = inlined_call_operand.hbm [shape: f32[8,8], index: 15, kind: output, shape index: {}]
  %s16 = sld [smem:[#allocation0]]
  $region98: #{tpu_custom_call.1} parent=0
    _
  %s18 = ssub.s32 1, %s16
  %s19 = scalar_select 0, %s18, %s16
  $region1: #{tpu_custom_call.1} parent=0
    #allocation2 [shape = 'u8[32768]{0}', space=vmem, size = 0x8000, scoped, tag = 'input window, operand 4, single buffered']
    #allocation3 [shape = 's32[1]{0}', space=sflag, size = 0x4, scoped, tag = 'scoped memory for tpu_custom_call.1']
    #allocation4 [shape = 's32[1]{0}', space=sflag, size = 0x4, scoped, tag = 'scoped memory for tpu_custom_call.1']
    #allocation5 [shape = 'u8[32768]{0}', space=vmem, size = 0x8000, scoped, tag = 'input window, operand 5, single buffered']
    #allocation6 [shape = 's32[1]{0}', space=sflag, size = 0x4, scoped, tag = 'scoped memory for tpu_custom_call.1']
    #allocation7 [shape = 'u8[32768]{0}', space=vmem, size = 0x8000, scoped, tag = 'input window, operand 6, single buffered']
    #allocation8 [shape = 'u8[512]{0}', space=vmem, size = 0x400, scoped, tag = 'input window, operand 7, single buffered']
    #allocation9 [shape = 's32[1]{0}', space=sflag, size = 0x4, scoped, tag = 'scoped memory for tpu_custom_call.1']
    #allocation10 [shape = 'u8[32768]{0}', space=vmem, size = 0x8000, scoped, tag = 'input window, operand 8, single buffered']
    #allocation11 [shape = 'u8[512]{0}', space=vmem, size = 0x400, scoped, tag = 'input window, operand 9, single buffered']
    #allocation12 [shape = 's32[1]{0}', space=sflag, size = 0x4, scoped, tag = 'scoped memory for tpu_custom_call.1']
    #allocation13 [shape = 'u8[32768]{0}', space=vmem, size = 0x8000, scoped, tag = 'input window, operand 11, single buffered']
    #allocation14 [shape = 'u8[4096]{0}', space=vmem, size = 0x1000, scoped, tag = 'output window, operand 0, single buffered']
    %20 = vsyncpa [#allocation3], 0
    %21 = vsyncpa [#allocation6], 0
    %22 = vsyncpa [#allocation9], 0
    %23 = vsyncpa [#allocation12], 0
    %24 = vsyncpa [#allocation4], 0
    // Predicated region
    $region2: #{tpu_custom_call.1} parent=1 // pred_check
      _
    $region3: #{tpu_custom_call.1} parent=1 // pred_check_branch
      %26 = sbr.rel (0) target = $region5
    $region4: #{tpu_custom_call.1} parent=1 // pred_region
      _
    $region5: #{tpu_custom_call.1} parent=1 // pred_fallthru
      _
    // Predicated region
    $region6: #{tpu_custom_call.1} parent=1 // pred_check
      _
    $region7: #{tpu_custom_call.1} parent=1 // pred_check_branch
      %28 = sbr.rel (0) target = $region9
    $region8: #{tpu_custom_call.1} parent=1 // pred_region
      _
    $region9: #{tpu_custom_call.1} parent=1 // pred_fallthru
      _
    // Predicated region
    $region10: #{tpu_custom_call.1} parent=1 // pred_check
      _
    $region11: #{tpu_custom_call.1} parent=1 // pred_check_branch
      %30 = sbr.rel (0) target = $region13
    $region12: #{tpu_custom_call.1} parent=1 // pred_region
      _
    $region13: #{tpu_custom_call.1} parent=1 // pred_fallthru
      _
    // Predicated region
    $region14: #{tpu_custom_call.1} parent=1 // pred_check
      _
    $region15: #{tpu_custom_call.1} parent=1 // pred_check_branch
      %32 = sbr.rel (0) target = $region17
    $region16: #{tpu_custom_call.1} parent=1 // pred_region
      _
    $region17: #{tpu_custom_call.1} parent=1 // pred_fallthru
      _
    // Predicated region
    $region18: #{tpu_custom_call.1} parent=1 // pred_check
      _
    $region19: #{tpu_custom_call.1} parent=1 // pred_check_branch
      %34 = sbr.rel (0) target = $region21
    $region20: #{tpu_custom_call.1} parent=1 // pred_region
      %s36 = ssub.s32 1024, 1024
      %37 = vsyncadd [#allocation3], %s36
      %s38 = sshll.u32 [#allocation2], 4
      %s39 = int_to_ptr.vmem [resolvable:$true] %s38
      %44 = dma.hbm_to_vmem [thread:$0]  %s4, 1024, %s39, [#allocation3], 64, 64, 4
    $region21: #{tpu_custom_call.1} parent=1 // pred_fallthru
      _
    // Predicated region
    $region22: #{tpu_custom_call.1} parent=1 // pred_check
      _
    $region23: #{tpu_custom_call.1} parent=1 // pred_check_branch
      %46 = sbr.rel (0) target = $region25
    $region24: #{tpu_custom_call.1} parent=1 // pred_region
      %s48 = ssub.s32 1024, 1024
      %49 = vsyncadd [#allocation6], %s48
      %s50 = sshll.u32 [#allocation5], 4
      %s51 = int_to_ptr.vmem [resolvable:$true] %s50
      %56 = dma.hbm_to_vmem [thread:$0]  %s5, 1024, %s51, [#allocation6], 64, 64, 4
    $region25: #{tpu_custom_call.1} parent=1 // pred_fallthru
      _
    // Predicated region
    $region26: #{tpu_custom_call.1} parent=1 // pred_check
      _
    $region27: #{tpu_custom_call.1} parent=1 // pred_check_branch
      %58 = sbr.rel (0) target = $region29
    $region28: #{tpu_custom_call.1} parent=1 // pred_region
      %s60 = ssub.s32 1024, 1024
      %61 = vsyncadd [#allocation6], %s60
      %s62 = sshll.u32 [#allocation7], 4
      %s63 = int_to_ptr.vmem [resolvable:$true] %s62
      %68 = dma.hbm_to_vmem [thread:$0]  %s6, 1024, %s63, [#allocation6], 64, 64, 4
    $region29: #{tpu_custom_call.1} parent=1 // pred_fallthru
      _
    // Predicated region
    $region30: #{tpu_custom_call.1} parent=1 // pred_check
      _
    $region31: #{tpu_custom_call.1} parent=1 // pred_check_branch
      %70 = sbr.rel (0) target = $region33
    $region32: #{tpu_custom_call.1} parent=1 // pred_region
      %s72 = ssub.s32 16, 16
      %73 = vsyncadd [#allocation9], %s72
      %s75 = sshll.u32 [#allocation8], 4
      %s76 = int_to_ptr.vmem [resolvable:$true] %s75
      %78 = dma.hbm_to_vmem [thread:$0]  %s7, 16, %s76, [#allocation9]
    $region33: #{tpu_custom_call.1} parent=1 // pred_fallthru
      _
    // Predicated region
    $region34: #{tpu_custom_call.1} parent=1 // pred_check
      _
    $region35: #{tpu_custom_call.1} parent=1 // pred_check_branch
      %80 = sbr.rel (0) target = $region37
    $region36: #{tpu_custom_call.1} parent=1 // pred_region
      %s82 = ssub.s32 1024, 1024
      %83 = vsyncadd [#allocation9], %s82
      %s84 = sshll.u32 [#allocation10], 4
      %s85 = int_to_ptr.vmem [resolvable:$true] %s84
      %90 = dma.hbm_to_vmem [thread:$0]  %s8, 1024, %s85, [#allocation9], 64, 64, 4
    $region37: #{tpu_custom_call.1} parent=1 // pred_fallthru
      _
    // Predicated region
    $region38: #{tpu_custom_call.1} parent=1 // pred_check
      _
    $region39: #{tpu_custom_call.1} parent=1 // pred_check_branch
      %92 = sbr.rel (0) target = $region41
    $region40: #{tpu_custom_call.1} parent=1 // pred_region
      %s94 = ssub.s32 16, 16
      %95 = vsyncadd [#allocation12], %s94
      %s97 = sshll.u32 [#allocation11], 4
      %s98 = int_to_ptr.vmem [resolvable:$true] %s97
      %100 = dma.hbm_to_vmem [thread:$0]  %s9, 16, %s98, [#allocation12]
    $region41: #{tpu_custom_call.1} parent=1 // pred_fallthru
      _
    // Predicated region
    $region42: #{tpu_custom_call.1} parent=1 // pred_check
      _
    $region43: #{tpu_custom_call.1} parent=1 // pred_check_branch
      %102 = sbr.rel (0) target = $region45
    $region44: #{tpu_custom_call.1} parent=1 // pred_region
      _
    $region45: #{tpu_custom_call.1} parent=1 // pred_fallthru
      _
    // Predicated region
    $region46: #{tpu_custom_call.1} parent=1 // pred_check
      _
    $region47: #{tpu_custom_call.1} parent=1 // pred_check_branch
      %104 = sbr.rel (0) target = $region49
    $region48: #{tpu_custom_call.1} parent=1 // pred_region
      %s106 = ssub.s32 1024, 1024
      %107 = vsyncadd [#allocation12], %s106
      %s108 = sshll.u32 [#allocation13], 4
      %s109 = int_to_ptr.vmem [resolvable:$true] %s108
      %114 = dma.hbm_to_vmem [thread:$0]  %s11, 1024, %s109, [#allocation12], 64, 64, 4
    $region49: #{tpu_custom_call.1} parent=1 // pred_fallthru
      _
    // Predicated region
    $region50: #{tpu_custom_call.1} parent=1 // pred_check
      _
    $region51: #{tpu_custom_call.1} parent=1 // pred_check_branch
      %116 = sbr.rel (0) target = $region53
    $region52: #{tpu_custom_call.1} parent=1 // pred_region
      _
    $region53: #{tpu_custom_call.1} parent=1 // pred_fallthru
      _
    // Predicated region
    $region54: #{tpu_custom_call.1} parent=1 // pred_check
      _
    $region55: #{tpu_custom_call.1} parent=1 // pred_check_branch
      %118 = sbr.rel (0) target = $region57
    $region56: #{tpu_custom_call.1} parent=1 // pred_region
      _
    $region57: #{tpu_custom_call.1} parent=1 // pred_fallthru
      _
    // Predicated region
    $region58: #{tpu_custom_call.1} parent=1 // pred_check
      _
    $region59: #{tpu_custom_call.1} parent=1 // pred_check_branch
      %120 = sbr.rel (0) target = $region61
    $region60: #{tpu_custom_call.1} parent=1 // pred_region
      _
    $region61: #{tpu_custom_call.1} parent=1 // pred_fallthru
      _
    // Predicated region
    $region62: #{tpu_custom_call.1} parent=1 // pred_check
      _
    $region63: #{tpu_custom_call.1} parent=1 // pred_check_branch
      %122 = sbr.rel (0) target = $region65
    $region64: #{tpu_custom_call.1} parent=1 // pred_region
      %123 = dma.done [#allocation3], 1024
    $region65: #{tpu_custom_call.1} parent=1 // pred_fallthru
      _
    // Predicated region
    $region66: #{tpu_custom_call.1} parent=1 // pred_check
      _
    $region67: #{tpu_custom_call.1} parent=1 // pred_check_branch
      %125 = sbr.rel (0) target = $region69
    $region68: #{tpu_custom_call.1} parent=1 // pred_region
      %126 = dma.done [#allocation6], 1024
    $region69: #{tpu_custom_call.1} parent=1 // pred_fallthru
      _
    // Predicated region
    $region70: #{tpu_custom_call.1} parent=1 // pred_check
      _
    $region71: #{tpu_custom_call.1} parent=1 // pred_check_branch
      %128 = sbr.rel (0) target = $region73
    $region72: #{tpu_custom_call.1} parent=1 // pred_region
      %129 = dma.done [#allocation6], 1024
    $region73: #{tpu_custom_call.1} parent=1 // pred_fallthru
      _
    // Predicated region
    $region74: #{tpu_custom_call.1} parent=1 // pred_check
      _
    $region75: #{tpu_custom_call.1} parent=1 // pred_check_branch
      %131 = sbr.rel (0) target = $region77
    $region76: #{tpu_custom_call.1} parent=1 // pred_region
      %132 = dma.done [#allocation9], 16
    $region77: #{tpu_custom_call.1} parent=1 // pred_fallthru
      _
    // Predicated region
    $region78: #{tpu_custom_call.1} parent=1 // pred_check
      _
    $region79: #{tpu_custom_call.1} parent=1 // pred_check_branch
      %134 = sbr.rel (0) target = $region81
    $region80: #{tpu_custom_call.1} parent=1 // pred_region
      %135 = dma.done [#allocation9], 1024
    $region81: #{tpu_custom_call.1} parent=1 // pred_fallthru
      _
    // Predicated region
    $region82: #{tpu_custom_call.1} parent=1 // pred_check
      _
    $region83: #{tpu_custom_call.1} parent=1 // pred_check_branch
      %137 = sbr.rel (0) target = $region85
    $region84: #{tpu_custom_call.1} parent=1 // pred_region
      %138 = dma.done [#allocation12], 16
    $region85: #{tpu_custom_call.1} parent=1 // pred_fallthru
      _
    // Predicated region
    $region86: #{tpu_custom_call.1} parent=1 // pred_check
      _
    $region87: #{tpu_custom_call.1} parent=1 // pred_check_branch
      %140 = sbr.rel (0) target = $region89
    $region88: #{tpu_custom_call.1} parent=1 // pred_region
      %141 = dma.done [#allocation12], 1024
    $region89: #{tpu_custom_call.1} parent=1 // pred_fallthru
      _
    %v143 = vld [vmem:[%s0] sm:$0xff]
    %v144 = vlaneseq
    %v145 = vand.u32 %v144, 127
    %146 = vset.pattern.permute.xlu0 0
    %147 = vperm.xlu0 %146, %v143
    %v148 = vpop.permute.xlu0 %147
    %vm149 = vcmp.eq.s32.totalorder %v148, %v145
    %v150 = vsel %vm149, 1, 0
    %v151 = vcvt.s32.f32 %v150
    %v152 = vpack.c.bf16 %v151, %v151
    %v153 = vld [vmem:[%s3] sm:$0xf]
    %v154 = vld [vmem:[%s3 + $0x4] sm:$0xf]
    %v155 = vld [vmem:[%s3 + $0x8] sm:$0xf]
    %v156 = vld [vmem:[%s3 + $0xc] sm:$0xf]
    %v157 = vld [vmem:[%s3 + $0x10] sm:$0xf]
    %v158 = vld [vmem:[%s3 + $0x14] sm:$0xf]
    %v159 = vld [vmem:[%s3 + $0x18] sm:$0xf]
    %v160 = vld [vmem:[%s3 + $0x1c] sm:$0xf]
    %v161 = vld [vmem:[%s3 + $0x20] sm:$0xf]
    %v162 = vld [vmem:[%s3 + $0x24] sm:$0xf]
    %v163 = vld [vmem:[%s3 + $0x28] sm:$0xf]
    %v164 = vld [vmem:[%s3 + $0x2c] sm:$0xf]
    %v165 = vld [vmem:[%s3 + $0x30] sm:$0xf]
    %v166 = vld [vmem:[%s3 + $0x34] sm:$0xf]
    %v167 = vld [vmem:[%s3 + $0x38] sm:$0xf]
    %v168 = vld [vmem:[%s3 + $0x3c] sm:$0xf]
    %v185 = vunpack.c.l.b16 %v153
    %v186 = vunpack.c.l.b16 %v154
    %v187 = vunpack.c.l.b16 %v155
    %v188 = vunpack.c.l.b16 %v156
    %v189 = vunpack.c.l.b16 %v157
    %v190 = vunpack.c.l.b16 %v158
    %v191 = vunpack.c.l.b16 %v159
    %v192 = vunpack.c.l.b16 %v160
    %v193 = vunpack.c.l.b16 %v161
    %v194 = vunpack.c.l.b16 %v162
    %v195 = vunpack.c.l.b16 %v163
    %v196 = vunpack.c.l.b16 %v164
    %v197 = vunpack.c.l.b16 %v165
    %v198 = vunpack.c.l.b16 %v166
    %v199 = vunpack.c.l.b16 %v167
    %v200 = vunpack.c.l.b16 %v168
    %v201 = vpack.c.b16 %v186, %v185
    %v202 = vpack.c.b16 %v188, %v187
    %v203 = vpack.c.b16 %v190, %v189
    %v204 = vpack.c.b16 %v192, %v191
    %v205 = vpack.c.b16 %v194, %v193
    %v206 = vpack.c.b16 %v196, %v195
    %v207 = vpack.c.b16 %v198, %v197
    %v208 = vpack.c.b16 %v200, %v199
    %217 = vmatprep.subr.bf16.mxu0 0
    %218 = vmatpush1.bf16.msra.mxu0 %v201
    %219 = vmatprep.subr.bf16.mxu0 0
    %220 = vmatpush1.bf16.msra.mxu0 %v202
    %221 = vmatprep.subr.bf16.mxu0 0
    %222 = vmatpush1.bf16.msra.mxu0 %v203
    %223 = vmatprep.subr.bf16.mxu0 0
    %224 = vmatpush1.bf16.msra.mxu0 %v204
    %225 = vmatprep.subr.bf16.mxu0 0
    %226 = vmatpush1.bf16.msra.mxu0 %v205
    %227 = vmatprep.subr.bf16.mxu0 0
    %228 = vmatpush1.bf16.msra.mxu0 %v206
    %229 = vmatprep.subr.bf16.mxu0 0
    %230 = vmatpush1.bf16.msra.mxu0 %v207
    %231 = vmatprep.subr.bf16.mxu0 0
    %232 = vmatpush1.bf16.msra.mxu0 %v208
    %233 = vmatprep.subr.bf16.mxu0 0
    %234 = vmatpush1.bf16.msra.mxu0 0
    %235 = vmatprep.subr.bf16.mxu0 0
    %236 = vmatpush1.bf16.msra.mxu0 0
    %237 = vmatprep.subr.bf16.mxu0 0
    %238 = vmatpush1.bf16.msra.mxu0 0
    %239 = vmatprep.subr.bf16.mxu0 0
    %240 = vmatpush1.bf16.msra.mxu0 0
    %241 = vmatprep.subr.bf16.mxu0 0
    %242 = vmatpush1.bf16.msra.mxu0 0
    %243 = vmatprep.subr.bf16.mxu0 0
    %244 = vmatpush1.bf16.msra.mxu0 0
    %245 = vmatprep.subr.bf16.mxu0 0
    %246 = vmatpush1.bf16.msra.mxu0 0
    %247 = vmatprep.subr.bf16.mxu0 0
    %248 = vmatpush1.bf16.msra.mxu0 0
    %249 = vmatprep.mubr.bf16.mxu0 0
    %250 = vmatmul.mubr.bf16.gmra.mrb[0].mxu0 %v152
    %v251 = vpop.f32.mrb[0].mxu0
    %v252 = vadd.f32 0.0, %v251
    %v253 = vpop.f32.mrb[0].mxu0
    %v254 = vpop.f32.mrb[0].mxu0
    %v255 = vpop.f32.mrb[0].mxu0
    %256 = vdwg.mxu0
    %v257 = vld [vmem:[%s1] sm:$0xff]
    %258 = vset.pattern.permute.xlu0 0
    %259 = vperm.xlu0 %258, %v257
    %v260 = vpop.permute.xlu0 %259
    %vm261 = vcmp.eq.s32.totalorder %v260, %v145
    %v262 = vsel %vm261, 1, 0
    %v263 = vcvt.s32.f32 %v262
    %v264 = vpack.c.bf16 %v263, %v263
    %265 = vmatprep.subr.bf16.mxu0 0
    %266 = vmatpush1.bf16.msra.mxu0 %v201
    %267 = vmatprep.subr.bf16.mxu0 0
    %268 = vmatpush1.bf16.msra.mxu0 %v202
    %269 = vmatprep.subr.bf16.mxu0 0
    %270 = vmatpush1.bf16.msra.mxu0 %v203
    %271 = vmatprep.subr.bf16.mxu0 0
    %272 = vmatpush1.bf16.msra.mxu0 %v204
    %273 = vmatprep.subr.bf16.mxu0 0
    %274 = vmatpush1.bf16.msra.mxu0 %v205
    %275 = vmatprep.subr.bf16.mxu0 0
    %276 = vmatpush1.bf16.msra.mxu0 %v206
    %277 = vmatprep.subr.bf16.mxu0 0
    %278 = vmatpush1.bf16.msra.mxu0 %v207
    %279 = vmatprep.subr.bf16.mxu0 0
    %280 = vmatpush1.bf16.msra.mxu0 %v208
    %281 = vmatprep.subr.bf16.mxu0 0
    %282 = vmatpush1.bf16.msra.mxu0 0
    %283 = vmatprep.subr.bf16.mxu0 0
    %284 = vmatpush1.bf16.msra.mxu0 0
    %285 = vmatprep.subr.bf16.mxu0 0
    %286 = vmatpush1.bf16.msra.mxu0 0
    %287 = vmatprep.subr.bf16.mxu0 0
    %288 = vmatpush1.bf16.msra.mxu0 0
    %289 = vmatprep.subr.bf16.mxu0 0
    %290 = vmatpush1.bf16.msra.mxu0 0
    %291 = vmatprep.subr.bf16.mxu0 0
    %292 = vmatpush1.bf16.msra.mxu0 0
    %293 = vmatprep.subr.bf16.mxu0 0
    %294 = vmatpush1.bf16.msra.mxu0 0
    %295 = vmatprep.subr.bf16.mxu0 0
    %296 = vmatpush1.bf16.msra.mxu0 0
    %297 = vmatprep.mubr.bf16.mxu0 0
    %298 = vmatmul.mubr.bf16.gmra.mrb[0].mxu0 %v264
    %v299 = vpop.f32.mrb[0].mxu0
    %v300 = vadd.f32 0.0, %v299
    %v301 = vpop.f32.mrb[0].mxu0
    %v302 = vpop.f32.mrb[0].mxu0
    %v303 = vpop.f32.mrb[0].mxu0
    %304 = vdwg.mxu0
    %v305 = vld [vmem:[%s2] sm:$0xff]
    %306 = vset.pattern.permute.xlu0 0
    %307 = vperm.xlu0 %306, %v305
    %v308 = vpop.permute.xlu0 %307
    %vm309 = vcmp.eq.s32.totalorder %v308, %v145
    %v310 = vsel %vm309, 1, 0
    %v311 = vcvt.s32.f32 %v310
    %v312 = vpack.c.bf16 %v311, %v311
    %v313 = vld [vmem:[#allocation2] sm:$0xf]
    %v314 = vld [vmem:[#allocation2 + $0x4] sm:$0xf]
    %v315 = vld [vmem:[#allocation2 + $0x8] sm:$0xf]
    %v316 = vld [vmem:[#allocation2 + $0xc] sm:$0xf]
    %v317 = vld [vmem:[#allocation2 + $0x10] sm:$0xf]
    %v318 = vld [vmem:[#allocation2 + $0x14] sm:$0xf]
    %v319 = vld [vmem:[#allocation2 + $0x18] sm:$0xf]
    %v320 = vld [vmem:[#allocation2 + $0x1c] sm:$0xf]
    %v321 = vld [vmem:[#allocation2 + $0x20] sm:$0xf]
    %v322 = vld [vmem:[#allocation2 + $0x24] sm:$0xf]
    %v323 = vld [vmem:[#allocation2 + $0x28] sm:$0xf]
    %v324 = vld [vmem:[#allocation2 + $0x2c] sm:$0xf]
    %v325 = vld [vmem:[#allocation2 + $0x30] sm:$0xf]
    %v326 = vld [vmem:[#allocation2 + $0x34] sm:$0xf]
    %v327 = vld [vmem:[#allocation2 + $0x38] sm:$0xf]
    %v328 = vld [vmem:[#allocation2 + $0x3c] sm:$0xf]
    %v345 = vunpack.c.l.b16 %v313
    %v346 = vunpack.c.l.b16 %v314
    %v347 = vunpack.c.l.b16 %v315
    %v348 = vunpack.c.l.b16 %v316
    %v349 = vunpack.c.l.b16 %v317
    %v350 = vunpack.c.l.b16 %v318
    %v351 = vunpack.c.l.b16 %v319
    %v352 = vunpack.c.l.b16 %v320
    %v353 = vunpack.c.l.b16 %v321
    %v354 = vunpack.c.l.b16 %v322
    %v355 = vunpack.c.l.b16 %v323
    %v356 = vunpack.c.l.b16 %v324
    %v357 = vunpack.c.l.b16 %v325
    %v358 = vunpack.c.l.b16 %v326
    %v359 = vunpack.c.l.b16 %v327
    %v360 = vunpack.c.l.b16 %v328
    %v361 = vpack.c.b16 %v346, %v345
    %v362 = vpack.c.b16 %v348, %v347
    %v363 = vpack.c.b16 %v350, %v349
    %v364 = vpack.c.b16 %v352, %v351
    %v365 = vpack.c.b16 %v354, %v353
    %v366 = vpack.c.b16 %v356, %v355
    %v367 = vpack.c.b16 %v358, %v357
    %v368 = vpack.c.b16 %v360, %v359
    %377 = vmatprep.subr.bf16.mxu0 0
    %378 = vmatpush1.bf16.msra.mxu0 %v361
    %379 = vmatprep.subr.bf16.mxu0 0
    %380 = vmatpush1.bf16.msra.mxu0 %v362
    %381 = vmatprep.subr.bf16.mxu0 0
    %382 = vmatpush1.bf16.msra.mxu0 %v363
    %383 = vmatprep.subr.bf16.mxu0 0
    %384 = vmatpush1.bf16.msra.mxu0 %v364
    %385 = vmatprep.subr.bf16.mxu0 0
    %386 = vmatpush1.bf16.msra.mxu0 %v365
    %387 = vmatprep.subr.bf16.mxu0 0
    %388 = vmatpush1.bf16.msra.mxu0 %v366
    %389 = vmatprep.subr.bf16.mxu0 0
    %390 = vmatpush1.bf16.msra.mxu0 %v367
    %391 = vmatprep.subr.bf16.mxu0 0
    %392 = vmatpush1.bf16.msra.mxu0 %v368
    %393 = vmatprep.subr.bf16.mxu0 0
    %394 = vmatpush1.bf16.msra.mxu0 0
    %395 = vmatprep.subr.bf16.mxu0 0
    %396 = vmatpush1.bf16.msra.mxu0 0
    %397 = vmatprep.subr.bf16.mxu0 0
    %398 = vmatpush1.bf16.msra.mxu0 0
    %399 = vmatprep.subr.bf16.mxu0 0
    %400 = vmatpush1.bf16.msra.mxu0 0
    %401 = vmatprep.subr.bf16.mxu0 0
    %402 = vmatpush1.bf16.msra.mxu0 0
    %403 = vmatprep.subr.bf16.mxu0 0
    %404 = vmatpush1.bf16.msra.mxu0 0
    %405 = vmatprep.subr.bf16.mxu0 0
    %406 = vmatpush1.bf16.msra.mxu0 0
    %407 = vmatprep.subr.bf16.mxu0 0
    %408 = vmatpush1.bf16.msra.mxu0 0
    %409 = vmatprep.mubr.bf16.mxu0 0
    %410 = vmatmul.mubr.bf16.gmra.mrb[0].mxu0 %v312
    %v411 = vpop.f32.mrb[0].mxu0
    %v412 = vadd.f32 0.0, %v411
    %v413 = vpop.f32.mrb[0].mxu0
    %v414 = vpop.f32.mrb[0].mxu0
    %v415 = vpop.f32.mrb[0].mxu0
    %416 = vdwg.mxu0
    %v417 = vpack.c.bf16 %v412, %v412
    %v418 = vld [vmem:[#allocation7] sm:$0xf]
    %v419 = vld [vmem:[#allocation7 + $0x4] sm:$0xf]
    %v420 = vld [vmem:[#allocation7 + $0x8] sm:$0xf]
    %v421 = vld [vmem:[#allocation7 + $0xc] sm:$0xf]
    %v422 = vld [vmem:[#allocation7 + $0x10] sm:$0xf]
    %v423 = vld [vmem:[#allocation7 + $0x14] sm:$0xf]
    %v424 = vld [vmem:[#allocation7 + $0x18] sm:$0xf]
    %v425 = vld [vmem:[#allocation7 + $0x1c] sm:$0xf]
    %v426 = vld [vmem:[#allocation7 + $0x20] sm:$0xf]
    %v427 = vld [vmem:[#allocation7 + $0x24] sm:$0xf]
    %v428 = vld [vmem:[#allocation7 + $0x28] sm:$0xf]
    %v429 = vld [vmem:[#allocation7 + $0x2c] sm:$0xf]
    %v430 = vld [vmem:[#allocation7 + $0x30] sm:$0xf]
    %v431 = vld [vmem:[#allocation7 + $0x34] sm:$0xf]
    %v432 = vld [vmem:[#allocation7 + $0x38] sm:$0xf]
    %v433 = vld [vmem:[#allocation7 + $0x3c] sm:$0xf]
    %v434 = vld [vmem:[#allocation8] sm:$0x1]
    %v436 = vlaneseq
    %v437 = vshrl.u32 %v436, 7
    %v438 = vsub.s32 0, %v437
    %v439 = vrot.slane %v434, %v438
    %v457 = vunpack.c.l.b16 %v418
    %v458 = vunpack.c.l.b16 %v419
    %v459 = vunpack.c.l.b16 %v420
    %v460 = vunpack.c.l.b16 %v421
    %v461 = vunpack.c.l.b16 %v422
    %v462 = vunpack.c.l.b16 %v423
    %v463 = vunpack.c.l.b16 %v424
    %v464 = vunpack.c.l.b16 %v425
    %v465 = vunpack.c.l.b16 %v426
    %v466 = vunpack.c.l.b16 %v427
    %v467 = vunpack.c.l.b16 %v428
    %v468 = vunpack.c.l.b16 %v429
    %v469 = vunpack.c.l.b16 %v430
    %v470 = vunpack.c.l.b16 %v431
    %v471 = vunpack.c.l.b16 %v432
    %v472 = vunpack.c.l.b16 %v433
    %v473 = vpack.c.b16 %v458, %v457
    %v474 = vpack.c.b16 %v460, %v459
    %v475 = vpack.c.b16 %v462, %v461
    %v476 = vpack.c.b16 %v464, %v463
    %v477 = vpack.c.b16 %v466, %v465
    %v478 = vpack.c.b16 %v468, %v467
    %v479 = vpack.c.b16 %v470, %v469
    %v480 = vpack.c.b16 %v472, %v471
    %489 = vmatprep.subr.bf16.mxu0 0
    %490 = vmatpush1.bf16.msra.mxu0 %v473
    %491 = vmatprep.subr.bf16.mxu0 0
    %492 = vmatpush1.bf16.msra.mxu0 %v474
    %493 = vmatprep.subr.bf16.mxu0 0
    %494 = vmatpush1.bf16.msra.mxu0 %v475
    %495 = vmatprep.subr.bf16.mxu0 0
    %496 = vmatpush1.bf16.msra.mxu0 %v476
    %497 = vmatprep.subr.bf16.mxu0 0
    %498 = vmatpush1.bf16.msra.mxu0 %v477
    %499 = vmatprep.subr.bf16.mxu0 0
    %500 = vmatpush1.bf16.msra.mxu0 %v478
    %501 = vmatprep.subr.bf16.mxu0 0
    %502 = vmatpush1.bf16.msra.mxu0 %v479
    %503 = vmatprep.subr.bf16.mxu0 0
    %504 = vmatpush1.bf16.msra.mxu0 %v480
    %505 = vmatprep.subr.bf16.mxu0 0
    %506 = vmatpush1.bf16.msra.mxu0 0
    %507 = vmatprep.subr.bf16.mxu0 0
    %508 = vmatpush1.bf16.msra.mxu0 0
    %509 = vmatprep.subr.bf16.mxu0 0
    %510 = vmatpush1.bf16.msra.mxu0 0
    %511 = vmatprep.subr.bf16.mxu0 0
    %512 = vmatpush1.bf16.msra.mxu0 0
    %513 = vmatprep.subr.bf16.mxu0 0
    %514 = vmatpush1.bf16.msra.mxu0 0
    %515 = vmatprep.subr.bf16.mxu0 0
    %516 = vmatpush1.bf16.msra.mxu0 0
    %517 = vmatprep.subr.bf16.mxu0 0
    %518 = vmatpush1.bf16.msra.mxu0 0
    %519 = vmatprep.subr.bf16.mxu0 0
    %520 = vmatpush1.bf16.msra.mxu0 0
    %521 = vmatprep.mubr.bf16.mxu0 0
    %522 = vmatmul.mubr.bf16.gmra.mrb[0].mxu0 %v417
    %v523 = vpop.f32.mrb[0].mxu0
    %v524 = vadd.f32 %v439, %v523
    %v525 = vpop.f32.mrb[0].mxu0
    %v526 = vpop.f32.mrb[0].mxu0
    %v527 = vpop.f32.mrb[0].mxu0
    %528 = vdwg.mxu0
    %v529 = vpack.c.bf16 %v252, %v252
    %v530 = vld [vmem:[#allocation5] sm:$0xf]
    %v531 = vld [vmem:[#allocation5 + $0x4] sm:$0xf]
    %v532 = vld [vmem:[#allocation5 + $0x8] sm:$0xf]
    %v533 = vld [vmem:[#allocation5 + $0xc] sm:$0xf]
    %v534 = vld [vmem:[#allocation5 + $0x10] sm:$0xf]
    %v535 = vld [vmem:[#allocation5 + $0x14] sm:$0xf]
    %v536 = vld [vmem:[#allocation5 + $0x18] sm:$0xf]
    %v537 = vld [vmem:[#allocation5 + $0x1c] sm:$0xf]
    %v538 = vld [vmem:[#allocation5 + $0x20] sm:$0xf]
    %v539 = vld [vmem:[#allocation5 + $0x24] sm:$0xf]
    %v540 = vld [vmem:[#allocation5 + $0x28] sm:$0xf]
    %v541 = vld [vmem:[#allocation5 + $0x2c] sm:$0xf]
    %v542 = vld [vmem:[#allocation5 + $0x30] sm:$0xf]
    %v543 = vld [vmem:[#allocation5 + $0x34] sm:$0xf]
    %v544 = vld [vmem:[#allocation5 + $0x38] sm:$0xf]
    %v545 = vld [vmem:[#allocation5 + $0x3c] sm:$0xf]
    %v562 = vunpack.c.l.b16 %v530
    %v563 = vunpack.c.l.b16 %v531
    %v564 = vunpack.c.l.b16 %v532
    %v565 = vunpack.c.l.b16 %v533
    %v566 = vunpack.c.l.b16 %v534
    %v567 = vunpack.c.l.b16 %v535
    %v568 = vunpack.c.l.b16 %v536
    %v569 = vunpack.c.l.b16 %v537
    %v570 = vunpack.c.l.b16 %v538
    %v571 = vunpack.c.l.b16 %v539
    %v572 = vunpack.c.l.b16 %v540
    %v573 = vunpack.c.l.b16 %v541
    %v574 = vunpack.c.l.b16 %v542
    %v575 = vunpack.c.l.b16 %v543
    %v576 = vunpack.c.l.b16 %v544
    %v577 = vunpack.c.l.b16 %v545
    %v578 = vpack.c.b16 %v563, %v562
    %v579 = vpack.c.b16 %v565, %v564
    %v580 = vpack.c.b16 %v567, %v566
    %v581 = vpack.c.b16 %v569, %v568
    %v582 = vpack.c.b16 %v571, %v570
    %v583 = vpack.c.b16 %v573, %v572
    %v584 = vpack.c.b16 %v575, %v574
    %v585 = vpack.c.b16 %v577, %v576
    %594 = vmatprep.subr.bf16.mxu0 0
    %595 = vmatpush1.bf16.msra.mxu0 %v578
    %596 = vmatprep.subr.bf16.mxu0 0
    %597 = vmatpush1.bf16.msra.mxu0 %v579
    %598 = vmatprep.subr.bf16.mxu0 0
    %599 = vmatpush1.bf16.msra.mxu0 %v580
    %600 = vmatprep.subr.bf16.mxu0 0
    %601 = vmatpush1.bf16.msra.mxu0 %v581
    %602 = vmatprep.subr.bf16.mxu0 0
    %603 = vmatpush1.bf16.msra.mxu0 %v582
    %604 = vmatprep.subr.bf16.mxu0 0
    %605 = vmatpush1.bf16.msra.mxu0 %v583
    %606 = vmatprep.subr.bf16.mxu0 0
    %607 = vmatpush1.bf16.msra.mxu0 %v584
    %608 = vmatprep.subr.bf16.mxu0 0
    %609 = vmatpush1.bf16.msra.mxu0 %v585
    %610 = vmatprep.subr.bf16.mxu0 0
    %611 = vmatpush1.bf16.msra.mxu0 0
    %612 = vmatprep.subr.bf16.mxu0 0
    %613 = vmatpush1.bf16.msra.mxu0 0
    %614 = vmatprep.subr.bf16.mxu0 0
    %615 = vmatpush1.bf16.msra.mxu0 0
    %616 = vmatprep.subr.bf16.mxu0 0
    %617 = vmatpush1.bf16.msra.mxu0 0
    %618 = vmatprep.subr.bf16.mxu0 0
    %619 = vmatpush1.bf16.msra.mxu0 0
    %620 = vmatprep.subr.bf16.mxu0 0
    %621 = vmatpush1.bf16.msra.mxu0 0
    %622 = vmatprep.subr.bf16.mxu0 0
    %623 = vmatpush1.bf16.msra.mxu0 0
    %624 = vmatprep.subr.bf16.mxu0 0
    %625 = vmatpush1.bf16.msra.mxu0 0
    %626 = vmatprep.mubr.bf16.mxu0 0
    %627 = vmatmul.mubr.bf16.gmra.mrb[0].mxu0 %v529
    %v628 = vpop.f32.mrb[0].mxu0
    %v629 = vadd.f32 %v524, %v628
    %v630 = vpop.f32.mrb[0].mxu0
    %v631 = vpop.f32.mrb[0].mxu0
    %v632 = vpop.f32.mrb[0].mxu0
    %633 = vdwg.mxu0
    %v634 = vmax.f32 %v629, 0.0
    %v635 = vpack.c.bf16 %v300, %v300
    %636 = vmatprep.subr.bf16.mxu0 0
    %637 = vmatpush1.bf16.msra.mxu0 %v578
    %638 = vmatprep.subr.bf16.mxu0 0
    %639 = vmatpush1.bf16.msra.mxu0 %v579
    %640 = vmatprep.subr.bf16.mxu0 0
    %641 = vmatpush1.bf16.msra.mxu0 %v580
    %642 = vmatprep.subr.bf16.mxu0 0
    %643 = vmatpush1.bf16.msra.mxu0 %v581
    %644 = vmatprep.subr.bf16.mxu0 0
    %645 = vmatpush1.bf16.msra.mxu0 %v582
    %646 = vmatprep.subr.bf16.mxu0 0
    %647 = vmatpush1.bf16.msra.mxu0 %v583
    %648 = vmatprep.subr.bf16.mxu0 0
    %649 = vmatpush1.bf16.msra.mxu0 %v584
    %650 = vmatprep.subr.bf16.mxu0 0
    %651 = vmatpush1.bf16.msra.mxu0 %v585
    %652 = vmatprep.subr.bf16.mxu0 0
    %653 = vmatpush1.bf16.msra.mxu0 0
    %654 = vmatprep.subr.bf16.mxu0 0
    %655 = vmatpush1.bf16.msra.mxu0 0
    %656 = vmatprep.subr.bf16.mxu0 0
    %657 = vmatpush1.bf16.msra.mxu0 0
    %658 = vmatprep.subr.bf16.mxu0 0
    %659 = vmatpush1.bf16.msra.mxu0 0
    %660 = vmatprep.subr.bf16.mxu0 0
    %661 = vmatpush1.bf16.msra.mxu0 0
    %662 = vmatprep.subr.bf16.mxu0 0
    %663 = vmatpush1.bf16.msra.mxu0 0
    %664 = vmatprep.subr.bf16.mxu0 0
    %665 = vmatpush1.bf16.msra.mxu0 0
    %666 = vmatprep.subr.bf16.mxu0 0
    %667 = vmatpush1.bf16.msra.mxu0 0
    %668 = vmatprep.mubr.bf16.mxu0 0
    %669 = vmatmul.mubr.bf16.gmra.mrb[0].mxu0 %v635
    %v670 = vpop.f32.mrb[0].mxu0
    %v671 = vadd.f32 %v524, %v670
    %v672 = vpop.f32.mrb[0].mxu0
    %v673 = vpop.f32.mrb[0].mxu0
    %v674 = vpop.f32.mrb[0].mxu0
    %675 = vdwg.mxu0
    %v676 = vmax.f32 %v671, 0.0
    %v677 = vpack.c.bf16 %v634, %v634
    %v678 = vld [vmem:[#allocation10] sm:$0xf]
    %v679 = vld [vmem:[#allocation10 + $0x4] sm:$0xf]
    %v680 = vld [vmem:[#allocation10 + $0x8] sm:$0xf]
    %v681 = vld [vmem:[#allocation10 + $0xc] sm:$0xf]
    %v682 = vld [vmem:[#allocation10 + $0x10] sm:$0xf]
    %v683 = vld [vmem:[#allocation10 + $0x14] sm:$0xf]
    %v684 = vld [vmem:[#allocation10 + $0x18] sm:$0xf]
    %v685 = vld [vmem:[#allocation10 + $0x1c] sm:$0xf]
    %v686 = vld [vmem:[#allocation10 + $0x20] sm:$0xf]
    %v687 = vld [vmem:[#allocation10 + $0x24] sm:$0xf]
    %v688 = vld [vmem:[#allocation10 + $0x28] sm:$0xf]
    %v689 = vld [vmem:[#allocation10 + $0x2c] sm:$0xf]
    %v690 = vld [vmem:[#allocation10 + $0x30] sm:$0xf]
    %v691 = vld [vmem:[#allocation10 + $0x34] sm:$0xf]
    %v692 = vld [vmem:[#allocation10 + $0x38] sm:$0xf]
    %v693 = vld [vmem:[#allocation10 + $0x3c] sm:$0xf]
    %v694 = vld [vmem:[#allocation11] sm:$0x1]
    %v696 = vlaneseq
    %v697 = vshrl.u32 %v696, 7
    %v698 = vsub.s32 0, %v697
    %v699 = vrot.slane %v694, %v698
    %v717 = vunpack.c.l.b16 %v678
    %v718 = vunpack.c.l.b16 %v679
    %v719 = vunpack.c.l.b16 %v680
    %v720 = vunpack.c.l.b16 %v681
    %v721 = vunpack.c.l.b16 %v682
    %v722 = vunpack.c.l.b16 %v683
    %v723 = vunpack.c.l.b16 %v684
    %v724 = vunpack.c.l.b16 %v685
    %v725 = vunpack.c.l.b16 %v686
    %v726 = vunpack.c.l.b16 %v687
    %v727 = vunpack.c.l.b16 %v688
    %v728 = vunpack.c.l.b16 %v689
    %v729 = vunpack.c.l.b16 %v690
    %v730 = vunpack.c.l.b16 %v691
    %v731 = vunpack.c.l.b16 %v692
    %v732 = vunpack.c.l.b16 %v693
    %v733 = vpack.c.b16 %v718, %v717
    %v734 = vpack.c.b16 %v720, %v719
    %v735 = vpack.c.b16 %v722, %v721
    %v736 = vpack.c.b16 %v724, %v723
    %v737 = vpack.c.b16 %v726, %v725
    %v738 = vpack.c.b16 %v728, %v727
    %v739 = vpack.c.b16 %v730, %v729
    %v740 = vpack.c.b16 %v732, %v731
    %749 = vmatprep.subr.bf16.mxu0 0
    %750 = vmatpush1.bf16.msra.mxu0 %v733
    %751 = vmatprep.subr.bf16.mxu0 0
    %752 = vmatpush1.bf16.msra.mxu0 %v734
    %753 = vmatprep.subr.bf16.mxu0 0
    %754 = vmatpush1.bf16.msra.mxu0 %v735
    %755 = vmatprep.subr.bf16.mxu0 0
    %756 = vmatpush1.bf16.msra.mxu0 %v736
    %757 = vmatprep.subr.bf16.mxu0 0
    %758 = vmatpush1.bf16.msra.mxu0 %v737
    %759 = vmatprep.subr.bf16.mxu0 0
    %760 = vmatpush1.bf16.msra.mxu0 %v738
    %761 = vmatprep.subr.bf16.mxu0 0
    %762 = vmatpush1.bf16.msra.mxu0 %v739
    %763 = vmatprep.subr.bf16.mxu0 0
    %764 = vmatpush1.bf16.msra.mxu0 %v740
    %765 = vmatprep.subr.bf16.mxu0 0
    %766 = vmatpush1.bf16.msra.mxu0 0
    %767 = vmatprep.subr.bf16.mxu0 0
    %768 = vmatpush1.bf16.msra.mxu0 0
    %769 = vmatprep.subr.bf16.mxu0 0
    %770 = vmatpush1.bf16.msra.mxu0 0
    %771 = vmatprep.subr.bf16.mxu0 0
    %772 = vmatpush1.bf16.msra.mxu0 0
    %773 = vmatprep.subr.bf16.mxu0 0
    %774 = vmatpush1.bf16.msra.mxu0 0
    %775 = vmatprep.subr.bf16.mxu0 0
    %776 = vmatpush1.bf16.msra.mxu0 0
    %777 = vmatprep.subr.bf16.mxu0 0
    %778 = vmatpush1.bf16.msra.mxu0 0
    %779 = vmatprep.subr.bf16.mxu0 0
    %780 = vmatpush1.bf16.msra.mxu0 0
    %781 = vmatprep.mubr.bf16.mxu0 0
    %782 = vmatmul.mubr.bf16.gmra.mrb[0].mxu0 %v677
    %v783 = vpop.f32.mrb[0].mxu0
    %v784 = vadd.f32 %v699, %v783
    %v785 = vpop.f32.mrb[0].mxu0
    %v786 = vpop.f32.mrb[0].mxu0
    %v787 = vpop.f32.mrb[0].mxu0
    %788 = vdwg.mxu0
    %v789 = vmax.f32 %v784, 0.0
    %v790 = vpack.c.bf16 %v676, %v676
    %791 = vmatprep.subr.bf16.mxu0 0
    %792 = vmatpush1.bf16.msra.mxu0 %v733
    %793 = vmatprep.subr.bf16.mxu0 0
    %794 = vmatpush1.bf16.msra.mxu0 %v734
    %795 = vmatprep.subr.bf16.mxu0 0
    %796 = vmatpush1.bf16.msra.mxu0 %v735
    %797 = vmatprep.subr.bf16.mxu0 0
    %798 = vmatpush1.bf16.msra.mxu0 %v736
    %799 = vmatprep.subr.bf16.mxu0 0
    %800 = vmatpush1.bf16.msra.mxu0 %v737
    %801 = vmatprep.subr.bf16.mxu0 0
    %802 = vmatpush1.bf16.msra.mxu0 %v738
    %803 = vmatprep.subr.bf16.mxu0 0
    %804 = vmatpush1.bf16.msra.mxu0 %v739
    %805 = vmatprep.subr.bf16.mxu0 0
    %806 = vmatpush1.bf16.msra.mxu0 %v740
    %807 = vmatprep.subr.bf16.mxu0 0
    %808 = vmatpush1.bf16.msra.mxu0 0
    %809 = vmatprep.subr.bf16.mxu0 0
    %810 = vmatpush1.bf16.msra.mxu0 0
    %811 = vmatprep.subr.bf16.mxu0 0
    %812 = vmatpush1.bf16.msra.mxu0 0
    %813 = vmatprep.subr.bf16.mxu0 0
    %814 = vmatpush1.bf16.msra.mxu0 0
    %815 = vmatprep.subr.bf16.mxu0 0
    %816 = vmatpush1.bf16.msra.mxu0 0
    %817 = vmatprep.subr.bf16.mxu0 0
    %818 = vmatpush1.bf16.msra.mxu0 0
    %819 = vmatprep.subr.bf16.mxu0 0
    %820 = vmatpush1.bf16.msra.mxu0 0
    %821 = vmatprep.subr.bf16.mxu0 0
    %822 = vmatpush1.bf16.msra.mxu0 0
    %823 = vmatprep.mubr.bf16.mxu0 0
    %824 = vmatmul.mubr.bf16.gmra.mrb[0].mxu0 %v790
    %v825 = vpop.f32.mrb[0].mxu0
    %v826 = vadd.f32 %v699, %v825
    %v827 = vpop.f32.mrb[0].mxu0
    %v828 = vpop.f32.mrb[0].mxu0
    %v829 = vpop.f32.mrb[0].mxu0
    %830 = vdwg.mxu0
    %v831 = vmax.f32 %v826, 0.0
    %v832 = vpack.c.bf16 %v789, %v789
    %v833 = vld [vmem:[%s10] sm:$0xf]
    %v834 = vld [vmem:[%s10 + $0x4] sm:$0xf]
    %v835 = vld [vmem:[%s10 + $0x8] sm:$0xf]
    %v836 = vld [vmem:[%s10 + $0xc] sm:$0xf]
    %v837 = vld [vmem:[%s10 + $0x10] sm:$0xf]
    %v838 = vld [vmem:[%s10 + $0x14] sm:$0xf]
    %v839 = vld [vmem:[%s10 + $0x18] sm:$0xf]
    %v840 = vld [vmem:[%s10 + $0x1c] sm:$0xf]
    %v841 = vld [vmem:[%s10 + $0x20] sm:$0xf]
    %v842 = vld [vmem:[%s10 + $0x24] sm:$0xf]
    %v843 = vld [vmem:[%s10 + $0x28] sm:$0xf]
    %v844 = vld [vmem:[%s10 + $0x2c] sm:$0xf]
    %v845 = vld [vmem:[%s10 + $0x30] sm:$0xf]
    %v846 = vld [vmem:[%s10 + $0x34] sm:$0xf]
    %v847 = vld [vmem:[%s10 + $0x38] sm:$0xf]
    %v848 = vld [vmem:[%s10 + $0x3c] sm:$0xf]
    %v849 = vpack.c.bf16 %v831, %v831
    %v850 = vld [vmem:[#allocation13] sm:$0xf]
    %v851 = vld [vmem:[#allocation13 + $0x4] sm:$0xf]
    %v852 = vld [vmem:[#allocation13 + $0x8] sm:$0xf]
    %v853 = vld [vmem:[#allocation13 + $0xc] sm:$0xf]
    %v854 = vld [vmem:[#allocation13 + $0x10] sm:$0xf]
    %v855 = vld [vmem:[#allocation13 + $0x14] sm:$0xf]
    %v856 = vld [vmem:[#allocation13 + $0x18] sm:$0xf]
    %v857 = vld [vmem:[#allocation13 + $0x1c] sm:$0xf]
    %v858 = vld [vmem:[#allocation13 + $0x20] sm:$0xf]
    %v859 = vld [vmem:[#allocation13 + $0x24] sm:$0xf]
    %v860 = vld [vmem:[#allocation13 + $0x28] sm:$0xf]
    %v861 = vld [vmem:[#allocation13 + $0x2c] sm:$0xf]
    %v862 = vld [vmem:[#allocation13 + $0x30] sm:$0xf]
    %v863 = vld [vmem:[#allocation13 + $0x34] sm:$0xf]
    %v864 = vld [vmem:[#allocation13 + $0x38] sm:$0xf]
    %v865 = vld [vmem:[#allocation13 + $0x3c] sm:$0xf]
    %v882 = vunpack.c.l.b16 %v850
    %v883 = vunpack.c.l.b16 %v851
    %v884 = vunpack.c.l.b16 %v852
    %v885 = vunpack.c.l.b16 %v853
    %v886 = vunpack.c.l.b16 %v854
    %v887 = vunpack.c.l.b16 %v855
    %v888 = vunpack.c.l.b16 %v856
    %v889 = vunpack.c.l.b16 %v857
    %v890 = vunpack.c.l.b16 %v858
    %v891 = vunpack.c.l.b16 %v859
    %v892 = vunpack.c.l.b16 %v860
    %v893 = vunpack.c.l.b16 %v861
    %v894 = vunpack.c.l.b16 %v862
    %v895 = vunpack.c.l.b16 %v863
    %v896 = vunpack.c.l.b16 %v864
    %v897 = vunpack.c.l.b16 %v865
    %v898 = vpack.c.b16 %v883, %v882
    %v899 = vpack.c.b16 %v885, %v884
    %v900 = vpack.c.b16 %v887, %v886
    %v901 = vpack.c.b16 %v889, %v888
    %v902 = vpack.c.b16 %v891, %v890
    %v903 = vpack.c.b16 %v893, %v892
    %v904 = vpack.c.b16 %v895, %v894
    %v905 = vpack.c.b16 %v897, %v896
    %914 = vmatprep.subr.bf16.mxu0 0
    %915 = vmatpush1.bf16.msra.mxu0 %v898
    %916 = vmatprep.subr.bf16.mxu0 0
    %917 = vmatpush1.bf16.msra.mxu0 %v899
    %918 = vmatprep.subr.bf16.mxu0 0
    %919 = vmatpush1.bf16.msra.mxu0 %v900
    %920 = vmatprep.subr.bf16.mxu0 0
    %921 = vmatpush1.bf16.msra.mxu0 %v901
    %922 = vmatprep.subr.bf16.mxu0 0
    %923 = vmatpush1.bf16.msra.mxu0 %v902
    %924 = vmatprep.subr.bf16.mxu0 0
    %925 = vmatpush1.bf16.msra.mxu0 %v903
    %926 = vmatprep.subr.bf16.mxu0 0
    %927 = vmatpush1.bf16.msra.mxu0 %v904
    %928 = vmatprep.subr.bf16.mxu0 0
    %929 = vmatpush1.bf16.msra.mxu0 %v905
    %930 = vmatprep.subr.bf16.mxu0 0
    %931 = vmatpush1.bf16.msra.mxu0 0
    %932 = vmatprep.subr.bf16.mxu0 0
    %933 = vmatpush1.bf16.msra.mxu0 0
    %934 = vmatprep.subr.bf16.mxu0 0
    %935 = vmatpush1.bf16.msra.mxu0 0
    %936 = vmatprep.subr.bf16.mxu0 0
    %937 = vmatpush1.bf16.msra.mxu0 0
    %938 = vmatprep.subr.bf16.mxu0 0
    %939 = vmatpush1.bf16.msra.mxu0 0
    %940 = vmatprep.subr.bf16.mxu0 0
    %941 = vmatpush1.bf16.msra.mxu0 0
    %942 = vmatprep.subr.bf16.mxu0 0
    %943 = vmatpush1.bf16.msra.mxu0 0
    %944 = vmatprep.subr.bf16.mxu0 0
    %945 = vmatpush1.bf16.msra.mxu0 0
    %946 = vmatprep.mubr.bf16.mxu0 0
    %947 = vmatmul.mubr.bf16.gmra.mrb[0].mxu0 %v849
    %v948 = vpop.f32.mrb[0].mxu0
    %v949 = vadd.f32 0.0, %v948
    %v950 = vpop.f32.mrb[0].mxu0
    %v951 = vpop.f32.mrb[0].mxu0
    %v952 = vpop.f32.mrb[0].mxu0
    %953 = vdwg.mxu0
    %v970 = vunpack.c.l.b16 %v833
    %v971 = vunpack.c.l.b16 %v834
    %v972 = vunpack.c.l.b16 %v835
    %v973 = vunpack.c.l.b16 %v836
    %v974 = vunpack.c.l.b16 %v837
    %v975 = vunpack.c.l.b16 %v838
    %v976 = vunpack.c.l.b16 %v839
    %v977 = vunpack.c.l.b16 %v840
    %v978 = vunpack.c.l.b16 %v841
    %v979 = vunpack.c.l.b16 %v842
    %v980 = vunpack.c.l.b16 %v843
    %v981 = vunpack.c.l.b16 %v844
    %v982 = vunpack.c.l.b16 %v845
    %v983 = vunpack.c.l.b16 %v846
    %v984 = vunpack.c.l.b16 %v847
    %v985 = vunpack.c.l.b16 %v848
    %v986 = vpack.c.b16 %v971, %v970
    %v987 = vpack.c.b16 %v973, %v972
    %v988 = vpack.c.b16 %v975, %v974
    %v989 = vpack.c.b16 %v977, %v976
    %v990 = vpack.c.b16 %v979, %v978
    %v991 = vpack.c.b16 %v981, %v980
    %v992 = vpack.c.b16 %v983, %v982
    %v993 = vpack.c.b16 %v985, %v984
    %1002 = vmatprep.subr.bf16.mxu0 0
    %1003 = vmatpush1.bf16.msra.mxu0 %v986
    %1004 = vmatprep.subr.bf16.mxu0 0
    %1005 = vmatpush1.bf16.msra.mxu0 %v987
    %1006 = vmatprep.subr.bf16.mxu0 0
    %1007 = vmatpush1.bf16.msra.mxu0 %v988
    %1008 = vmatprep.subr.bf16.mxu0 0
    %1009 = vmatpush1.bf16.msra.mxu0 %v989
    %1010 = vmatprep.subr.bf16.mxu0 0
    %1011 = vmatpush1.bf16.msra.mxu0 %v990
    %1012 = vmatprep.subr.bf16.mxu0 0
    %1013 = vmatpush1.bf16.msra.mxu0 %v991
    %1014 = vmatprep.subr.bf16.mxu0 0
    %1015 = vmatpush1.bf16.msra.mxu0 %v992
    %1016 = vmatprep.subr.bf16.mxu0 0
    %1017 = vmatpush1.bf16.msra.mxu0 %v993
    %1018 = vmatprep.subr.bf16.mxu0 0
    %1019 = vmatpush1.bf16.msra.mxu0 0
    %1020 = vmatprep.subr.bf16.mxu0 0
    %1021 = vmatpush1.bf16.msra.mxu0 0
    %1022 = vmatprep.subr.bf16.mxu0 0
    %1023 = vmatpush1.bf16.msra.mxu0 0
    %1024 = vmatprep.subr.bf16.mxu0 0
    %1025 = vmatpush1.bf16.msra.mxu0 0
    %1026 = vmatprep.subr.bf16.mxu0 0
    %1027 = vmatpush1.bf16.msra.mxu0 0
    %1028 = vmatprep.subr.bf16.mxu0 0
    %1029 = vmatpush1.bf16.msra.mxu0 0
    %1030 = vmatprep.subr.bf16.mxu0 0
    %1031 = vmatpush1.bf16.msra.mxu0 0
    %1032 = vmatprep.subr.bf16.mxu0 0
    %1033 = vmatpush1.bf16.msra.mxu0 0
    %1034 = vmatprep.mubr.bf16.mxu0 0
    %1035 = vmatmul.mubr.bf16.gmra.mrb[0].mxu0 %v832
    %v1036 = vpop.f32.mrb[0].mxu0
    %v1037 = vadd.f32 %v949, %v1036
    %v1038 = vpop.f32.mrb[0].mxu0
    %v1039 = vpop.f32.mrb[0].mxu0
    %v1040 = vpop.f32.mrb[0].mxu0
    %1041 = vdwg.mxu0
    %v1042 = vld [vmem:[%s12] sm:$0x1]
    %v1044 = vlaneseq
    %v1045 = vshrl.u32 %v1044, 7
    %v1046 = vsub.s32 0, %v1045
    %v1047 = vrot.slane %v1042, %v1046
    %v1049 = vadd.f32 %v1037, %v1047
    %v1050 = vmax.f32 %v1049, 0.0
    %v1051 = vpack.c.bf16 %v1050, %v1050
    %v1052 = vld [vmem:[%s13] sm:$0xf]
    %v1053 = vld [vmem:[%s13 + $0x4] sm:$0xf]
    %v1054 = vld [vmem:[%s13 + $0x8] sm:$0xf]
    %v1055 = vld [vmem:[%s13 + $0xc] sm:$0xf]
    %v1056 = vld [vmem:[%s13 + $0x10] sm:$0xf]
    %v1057 = vld [vmem:[%s13 + $0x14] sm:$0xf]
    %v1058 = vld [vmem:[%s13 + $0x18] sm:$0xf]
    %v1059 = vld [vmem:[%s13 + $0x1c] sm:$0xf]
    %v1060 = vld [vmem:[%s13 + $0x20] sm:$0xf]
    %v1061 = vld [vmem:[%s13 + $0x24] sm:$0xf]
    %v1062 = vld [vmem:[%s13 + $0x28] sm:$0xf]
    %v1063 = vld [vmem:[%s13 + $0x2c] sm:$0xf]
    %v1064 = vld [vmem:[%s13 + $0x30] sm:$0xf]
    %v1065 = vld [vmem:[%s13 + $0x34] sm:$0xf]
    %v1066 = vld [vmem:[%s13 + $0x38] sm:$0xf]
    %v1067 = vld [vmem:[%s13 + $0x3c] sm:$0xf]
    %v1068 = vld [vmem:[%s14] sm:$0x1]
    %v1070 = vlaneseq
    %v1071 = vshrl.u32 %v1070, 7
    %v1072 = vsub.s32 0, %v1071
    %v1073 = vrot.slane %v1068, %v1072
    %v1091 = vunpack.c.l.b16 %v1052
    %v1092 = vunpack.c.l.b16 %v1053
    %v1093 = vunpack.c.l.b16 %v1054
    %v1094 = vunpack.c.l.b16 %v1055
    %v1095 = vunpack.c.l.b16 %v1056
    %v1096 = vunpack.c.l.b16 %v1057
    %v1097 = vunpack.c.l.b16 %v1058
    %v1098 = vunpack.c.l.b16 %v1059
    %v1099 = vunpack.c.l.b16 %v1060
    %v1100 = vunpack.c.l.b16 %v1061
    %v1101 = vunpack.c.l.b16 %v1062
    %v1102 = vunpack.c.l.b16 %v1063
    %v1103 = vunpack.c.l.b16 %v1064
    %v1104 = vunpack.c.l.b16 %v1065
    %v1105 = vunpack.c.l.b16 %v1066
    %v1106 = vunpack.c.l.b16 %v1067
    %v1107 = vpack.c.b16 %v1092, %v1091
    %v1108 = vpack.c.b16 %v1094, %v1093
    %v1109 = vpack.c.b16 %v1096, %v1095
    %v1110 = vpack.c.b16 %v1098, %v1097
    %v1111 = vpack.c.b16 %v1100, %v1099
    %v1112 = vpack.c.b16 %v1102, %v1101
    %v1113 = vpack.c.b16 %v1104, %v1103
    %v1114 = vpack.c.b16 %v1106, %v1105
    %1123 = vmatprep.subr.bf16.mxu0 0
    %1124 = vmatpush1.bf16.msra.mxu0 %v1107
    %1125 = vmatprep.subr.bf16.mxu0 0
    %1126 = vmatpush1.bf16.msra.mxu0 %v1108
    %1127 = vmatprep.subr.bf16.mxu0 0
    %1128 = vmatpush1.bf16.msra.mxu0 %v1109
    %1129 = vmatprep.subr.bf16.mxu0 0
    %1130 = vmatpush1.bf16.msra.mxu0 %v1110
    %1131 = vmatprep.subr.bf16.mxu0 0
    %1132 = vmatpush1.bf16.msra.mxu0 %v1111
    %1133 = vmatprep.subr.bf16.mxu0 0
    %1134 = vmatpush1.bf16.msra.mxu0 %v1112
    %1135 = vmatprep.subr.bf16.mxu0 0
    %1136 = vmatpush1.bf16.msra.mxu0 %v1113
    %1137 = vmatprep.subr.bf16.mxu0 0
    %1138 = vmatpush1.bf16.msra.mxu0 %v1114
    %1139 = vmatprep.subr.bf16.mxu0 0
    %1140 = vmatpush1.bf16.msra.mxu0 0
    %1141 = vmatprep.subr.bf16.mxu0 0
    %1142 = vmatpush1.bf16.msra.mxu0 0
    %1143 = vmatprep.subr.bf16.mxu0 0
    %1144 = vmatpush1.bf16.msra.mxu0 0
    %1145 = vmatprep.subr.bf16.mxu0 0
    %1146 = vmatpush1.bf16.msra.mxu0 0
    %1147 = vmatprep.subr.bf16.mxu0 0
    %1148 = vmatpush1.bf16.msra.mxu0 0
    %1149 = vmatprep.subr.bf16.mxu0 0
    %1150 = vmatpush1.bf16.msra.mxu0 0
    %1151 = vmatprep.subr.bf16.mxu0 0
    %1152 = vmatpush1.bf16.msra.mxu0 0
    %1153 = vmatprep.subr.bf16.mxu0 0
    %1154 = vmatpush1.bf16.msra.mxu0 0
    %1155 = vmatprep.mubr.bf16.mxu0 0
    %1156 = vmatmul.mubr.bf16.gmra.mrb[0].mxu0 %v1051
    %v1157 = vpop.f32.mrb[0].mxu0
    %v1158 = vadd.f32 %v1073, %v1157
    %v1159 = vpop.f32.mrb[0].mxu0
    %v1160 = vpop.f32.mrb[0].mxu0
    %v1161 = vpop.f32.mrb[0].mxu0
    %1162 = vdwg.mxu0
    %vm1163 = vcmask 64512
    %1164 = vst.msk [vmem:[#allocation14] sm:$0xff] %vm1163, %v1158
    // Predicated region
    $region90: #{tpu_custom_call.1} parent=1 // pred_check
      _
    $region91: #{tpu_custom_call.1} parent=1 // pred_check_branch
      %1166 = sbr.rel (0) target = $region93
    $region92: #{tpu_custom_call.1} parent=1 // pred_region
      %s1168 = ssub.s32 128, 128
      %1169 = vsyncadd [#allocation4], %s1168
      %s1171 = sshll.u32 [#allocation14], 4
      %s1172 = int_to_ptr.vmem [resolvable:$true] %s1171
      %1174 = dma.vmem_to_hbm [thread:$0]  %s1172, 128, %s15, [#allocation4]
    $region93: #{tpu_custom_call.1} parent=1 // pred_fallthru
      _
    // Predicated region
    $region94: #{tpu_custom_call.1} parent=1 // pred_check
      _
    $region95: #{tpu_custom_call.1} parent=1 // pred_check_branch
      %1176 = sbr.rel (0) target = $region97
    $region96: #{tpu_custom_call.1} parent=1 // pred_region
      %1177 = dma.done [#allocation4], 128
    $region97: #{tpu_custom_call.1} parent=1 // pred_fallthru
      _
    %1178 = vsyncpa [#allocation3], 1
    %1179 = vsyncpa [#allocation6], 1
    %1180 = vsyncpa [#allocation9], 1
    %1181 = vsyncpa [#allocation12], 1
    %1182 = vsyncpa [#allocation4], 1

</llo_original>
